<compile_context>
chip_gen: v7x
topology: tpu7x:2x2x1
jax: 0.10.0
libtpu: 0.0.40
codegen_flags: <defaults>
</compile_context>

<pallas_src>
import functools

import jax
import jax.numpy as jnp
from jax.experimental import pallas as pl
from jax.experimental.pallas import tpu as pltpu


# -----------------------------------------------------------------------------
# Pallas kernel: batched GEMM with fused bias + optional ReLU epilogue.
#   out[p] = act(lhs[p] @ rhs[p] + bias)        (f32 accumulate, cast on store)
# -----------------------------------------------------------------------------
def _bgemm_kernel(lhs_ref, rhs_ref, bias_ref, o_ref, *, apply_relu):
    acc = jnp.dot(lhs_ref[...], rhs_ref[...],
                  preferred_element_type=jnp.float32)
    acc = acc + bias_ref[...]          # (R,1) or (1,N) bias broadcasts in f32
    if apply_relu:
        acc = jnp.maximum(acc, 0.0)
    o_ref[...] = acc.astype(o_ref.dtype)


def batched_gemm_bias_act(lhs, rhs, bias2d, *, apply_relu, out_dtype,
                          max_tn=512):
    """lhs: (P, R, K), rhs: (P, K, N), bias2d: (R,1) or (1,N) f32.

    Returns (P, R, N) = act(lhs @ rhs + bias) in out_dtype.  N is the big
    (lane) dimension; it is tiled in multiples of 128 so output stores are
    lane-dense and never masked (when N >= 128).
    """
    P, R, K = lhs.shape
    P2, K2, N = rhs.shape
    assert P == P2 and K == K2, (lhs.shape, rhs.shape)

    # Largest lane tile (multiple of 128) that divides N; tiny N -> full extent.
    if N % 128 == 0:
        tn = min(max_tn, N)
        while N % tn:
            tn -= 128
    else:
        tn = N
    grid = (P, N // tn)

    br, bc = bias2d.shape
    if bc == 1:                                   # per-row (per-Cout) bias
        bias_spec = pl.BlockSpec((br, 1), lambda p, n: (0, 0))
    else:                                         # per-column bias
        bias_spec = pl.BlockSpec((br, tn), lambda p, n: (0, n))

    return pl.pallas_call(
        functools.partial(_bgemm_kernel, apply_relu=apply_relu),
        out_shape=jax.ShapeDtypeStruct((P, R, N), out_dtype),
        grid_spec=pltpu.PrefetchScalarGridSpec(
            num_scalar_prefetch=0,
            grid=grid,
            in_specs=[
                pl.BlockSpec((None, R, K), lambda p, n: (p, 0, 0)),
                pl.BlockSpec((None, K, tn), lambda p, n: (p, 0, n)),
                bias_spec,
            ],
            out_specs=pl.BlockSpec((None, R, tn), lambda p, n: (p, 0, n)),
        ),
        compiler_params=pltpu.CompilerParams(
            dimension_semantics=("parallel", "parallel")),
    )(lhs, rhs, bias2d)


# -----------------------------------------------------------------------------
# Conv layers as batched GEMMs.  Activations flow channel-first: (C, B, D, H, W)
# so the flattened spatial dim lands on lanes.
# -----------------------------------------------------------------------------
def subpixel_deconv3d_s2(x_cf, lhs_ph, bias_col, *, apply_relu, out_dtype):
    """ConvTranspose3d(kernel=4, stride=2, padding=1) [+ReLU], sub-pixel form.

    x_cf:    (Cin, B, D, H, W)    activation (bf16/f32)
    lhs_ph:  (8, Cout, 8*Cin)     per-phase 2x2x2 sub-kernels (bf16, prepacked)
    bias_col:(Cout, 1) f32
    returns  (Cout, B, 2D, 2H, 2W) in out_dtype
    """
    Cin, B, D, H, W = x_cf.shape
    P, Cout, K = lhs_ph.shape
    assert P == 8 and K == 8 * Cin, (lhs_ph.shape, Cin)
    M = B * D * H * W

    xp = jnp.pad(x_cf, ((0, 0), (0, 0), (1, 1), (1, 1), (1, 1)))
    rhs_phases = []
    for rd in range(2):
        for rh in range(2):
            for rw in range(2):
                slabs = [xp[:, :,
                            rd + td:rd + td + D,
                            rh + th:rh + th + H,
                            rw + tw:rw + tw + W]
                         for td in range(2) for th in range(2)
                         for tw in range(2)]
                # (8 taps, Cin, B, D, H, W) -> (8*Cin, M); K order = (tap, cin)
                rhs_phases.append(jnp.stack(slabs, axis=0).reshape(8 * Cin, M))
    rhs = jnp.stack(rhs_phases, axis=0).astype(jnp.bfloat16)      # (8, 8Cin, M)

    out = batched_gemm_bias_act(lhs_ph, rhs, bias_col,
                                apply_relu=apply_relu, out_dtype=out_dtype)
    # Interleave the 8 phase outputs: out[2j+r] per spatial dim.
    out = out.reshape(2, 2, 2, Cout, B, D, H, W)        # (rd,rh,rw,Co,B,D,H,W)
    out = jnp.transpose(out, (3, 4, 5, 0, 6, 1, 7, 2))  # (Co,B,D,rd,H,rh,W,rw)
    return out.reshape(Cout, B, 2 * D, 2 * H, 2 * W)


def deconv3d_s1(x_cf, lhs_mat, bias_col, *, k, pad, apply_relu, out_dtype):
    """ConvTranspose3d(kernel=k, stride=1, padding=k-1-pad) [+act]:
    stride-1 correlation with the (pre-flipped, prepacked) kernel.

    x_cf: (Cin, B, D, H, W); lhs_mat: (1, Cout, k^3*Cin) bf16; bias: (Cout,1).
    """
    Cin, B, D, H, W = x_cf.shape
    _, Cout, K = lhs_mat.shape
    assert K == k * k * k * Cin
    Do, Ho, Wo = (D + 2 * pad - (k - 1), H + 2 * pad - (k - 1),
                  W + 2 * pad - (k - 1))
    M = B * Do * Ho * Wo

    xp = jnp.pad(x_cf, ((0, 0), (0, 0), (pad, pad), (pad, pad), (pad, pad)))
    slabs = [xp[:, :, td:td + Do, th:th + Ho, tw:tw + Wo]
             for td in range(k) for th in range(k) for tw in range(k)]
    rhs = jnp.stack(slabs, axis=0).reshape(1, K, M).astype(jnp.bfloat16)

    out = batched_gemm_bias_act(lhs_mat, rhs, bias_col,
                                apply_relu=apply_relu, out_dtype=out_dtype)
    return out.reshape(Cout, B, Do, Ho, Wo)


# -----------------------------------------------------------------------------
# Parameters (torch layouts) + one-time repacking for the kernels.
# -----------------------------------------------------------------------------
def init_state_decoder_params(key, Ny, Nx, Nt, Nchannel, latent_dim, cbc):
    flat = (Ny // 4) * (Nx // 4) * (Nt // 4) * cbc * 4
    ks = jax.random.split(key, 8)

    def unif(k, shape, fan_in):
        bound = 1.0 / jnp.sqrt(jnp.float32(fan_in))
        return jax.random.uniform(k, shape, jnp.float32, -bound, bound)

    return {
        "fc1_w": unif(ks[0], (flat, latent_dim), latent_dim),  # torch Linear
        "fc1_b": unif(ks[1], (flat,), latent_dim),
        "dc1_w": unif(ks[2], (cbc * 4, cbc * 2, 4, 4, 4), cbc * 4 * 64),
        "dc1_b": unif(ks[3], (cbc * 2,), cbc * 4 * 64),
        "dc2_w": unif(ks[4], (cbc * 2, cbc, 4, 4, 4), cbc * 2 * 64),
        "dc2_b": unif(ks[5], (cbc,), cbc * 2 * 64),
        "dc3_w": unif(ks[6], (cbc, Nchannel, 3, 3, 3), cbc * 27),
        "dc3_b": unif(ks[7], (Nchannel,), cbc * 27),
    }


def prepare_decoder_params(params):
    """One-time weight repack (flip, phase-subsample, transpose, bf16)."""
    def subpixel_w(w):                       # (Cin, Cout, 4, 4, 4) torch layout
        Cin, Cout, k, _, _ = w.shape
        assert k == 4
        wflip = jnp.flip(w, axis=(2, 3, 4))
        phases = []
        for rd in range(2):
            for rh in range(2):
                for rw in range(2):
                    ws = wflip[:, :, rd::2, rh::2, rw::2]     # (Cin,Cout,2,2,2)
                    ws = jnp.transpose(ws, (2, 3, 4, 0, 1))   # (2,2,2,Cin,Cout)
                    phases.append(ws.reshape(8 * Cin, Cout).T)
        return jnp.stack(phases, axis=0).astype(jnp.bfloat16)  # (8,Cout,8Cin)

    def s1_w(w):                             # (Cin, Cout, 3, 3, 3)
        Cin, Cout, k, _, _ = w.shape
        wflip = jnp.flip(w, axis=(2, 3, 4))
        wm = jnp.transpose(wflip, (2, 3, 4, 0, 1)).reshape(k ** 3 * Cin, Cout).T
        return wm[None].astype(jnp.bfloat16)                   # (1,Cout,27Cin)

    return {
        "fc1_wT": params["fc1_w"].T[None].astype(jnp.bfloat16),  # (1,latent,flat)
        "fc1_b": params["fc1_b"].reshape(1, -1).astype(jnp.float32),
        "dc1_lhs": subpixel_w(params["dc1_w"]),
        "dc1_b": params["dc1_b"].reshape(-1, 1).astype(jnp.float32),
        "dc2_lhs": subpixel_w(params["dc2_w"]),
        "dc2_b": params["dc2_b"].reshape(-1, 1).astype(jnp.float32),
        "dc3_lhs": s1_w(params["dc3_w"]),
        "dc3_b": params["dc3_b"].reshape(-1, 1).astype(jnp.float32),
    }


@functools.partial(jax.jit, static_argnames=("Nt", "Ny", "Nx", "cbc"))
def state_decoder_forward(prep, z, *, Nt, Ny, Nx, cbc):
    B = z.shape[0]
    C0, D0, H0, W0 = cbc * 4, Nt // 4, Ny // 4, Nx // 4
    # fc1 + ReLU fused in the Pallas GEMM; flat (=128) sits on lanes.
    h = batched_gemm_bias_act(z.astype(jnp.bfloat16)[None], prep["fc1_wT"],
                              prep["fc1_b"], apply_relu=True,
                              out_dtype=jnp.bfloat16)            # (1, B, flat)
    # torch: view(-1, C0, D0, H0, W0); then to channel-first (C, B, D, H, W).
    h = h.reshape(B, C0, D0, H0, W0).transpose(1, 0, 2, 3, 4)
    h = subpixel_deconv3d_s2(h, prep["dc1_lhs"], prep["dc1_b"],
                             apply_relu=True, out_dtype=jnp.bfloat16)
    h = subpixel_deconv3d_s2(h, prep["dc2_lhs"], prep["dc2_b"],
                             apply_relu=True, out_dtype=jnp.bfloat16)
    x = deconv3d_s1(h, prep["dc3_lhs"], prep["dc3_b"], k=3, pad=1,
                    apply_relu=False, out_dtype=jnp.float32)  # (Co,B,Nt,Ny,Nx)
    return jnp.transpose(x, (1, 0, 2, 3, 4))                  # NCDHW


# -----------------------------------------------------------------------------
# Plain-XLA reference of the PyTorch forward (for a numerical cross-check).
# -----------------------------------------------------------------------------
def _ref_deconv3d(x, w, b, stride, padding):
    # x: (B, Cin, D, H, W); w: (Cin, Cout, k, k, k) torch ConvTranspose3d weight
    k = w.shape[2]
    wf = jnp.flip(w, axis=(2, 3, 4)).transpose(1, 0, 2, 3, 4)   # (Cout,Cin,k,k,k)
    pad = k - 1 - padding
    out = jax.lax.conv_general_dilated(
        x, wf, window_strides=(1, 1, 1), padding=[(pad, pad)] * 3,
        lhs_dilation=(stride,) * 3,
        dimension_numbers=("NCDHW", "OIDHW", "NCDHW"),
        precision=jax.lax.Precision.HIGHEST)
    return out + b.reshape(1, -1, 1, 1, 1)


def reference_forward(params, z, Nt, Ny, Nx, cbc):
    h = jnp.maximum(
        jnp.dot(z, params["fc1_w"].T, precision=jax.lax.Precision.HIGHEST)
        + params["fc1_b"], 0.0)
    h = h.reshape(-1, cbc * 4, Nt // 4, Ny // 4, Nx // 4)
    h = jnp.maximum(_ref_deconv3d(h, params["dc1_w"], params["dc1_b"], 2, 1), 0.0)
    h = jnp.maximum(_ref_deconv3d(h, params["dc2_w"], params["dc2_b"], 2, 1), 0.0)
    return _ref_deconv3d(h, params["dc3_w"], params["dc3_b"], 1, 1)


if __name__ == "__main__":
    Ny, Nx, Nt = 8, 8, 8
    Nchannel = 3
    latent_dim = 32
    conv_base_channel = 4
    batch = 2

    key = jax.random.PRNGKey(0)
    k_param, k_z = jax.random.split(key)
    params = init_state_decoder_params(
        k_param, Ny, Nx, Nt, Nchannel, latent_dim, conv_base_channel)
    prep = prepare_decoder_params(params)     # hoisted, one-time weight repack
    z = jax.random.normal(k_z, (batch, latent_dim), jnp.float32)

    x_recon = state_decoder_forward(prep, z, Nt=Nt, Ny=Ny, Nx=Nx,
                                    cbc=conv_base_channel)
    x_recon = jax.block_until_ready(x_recon)

    assert x_recon.shape == (batch, Nchannel, Nt, Ny, Nx), x_recon.shape
    assert bool(jnp.all(jnp.isfinite(x_recon)))

    # Cross-check (bf16 MXU path vs f32 XLA reference).
    ref = reference_forward(params, z, Nt, Ny, Nx, conv_base_channel)
    err = float(jnp.max(jnp.abs(x_recon - ref)) /
                (jnp.max(jnp.abs(ref)) + 1e-6))
    assert err < 0.1, f"mismatch vs reference: normalized max err = {err}"
    print("KERNEL_OK")
</pallas_src>

<mosaic_0001>
module attributes {stable_mosaic.version = 11 : i64} {
  func.func @_bgemm_kernel(%arg0: i32, %arg1: i32, %arg2: memref<1x2x32xbf16, #tpu.memory_space<vmem>>, %arg3: memref<1x32x128xbf16, #tpu.memory_space<vmem>>, %arg4: memref<1x128xf32, #tpu.memory_space<vmem>>, %arg5: memref<1x2x128xbf16, #tpu.memory_space<vmem>>) attributes {dimension_semantics = [#tpu.dimension_semantics<parallel>, #tpu.dimension_semantics<parallel>], iteration_bounds = array<i64: 1, 1>, scalar_prefetch = 0 : i64, scratch_operands = 0 : i64, tpu.core_type = #tpu.core_type<tc>, window_params = [{transform_indices = @transform_0, window_bounds = array<i64: 1, 2, 32>}, {transform_indices = @transform_1, window_bounds = array<i64: 1, 32, 128>}, {transform_indices = @transform_2, window_bounds = array<i64: 1, 128>}, {transform_indices = @transform_3, window_bounds = array<i64: 1, 2, 128>}]} {
    %c0 = arith.constant 0 : index
    %c0_0 = arith.constant 0 : index
    %c0_1 = arith.constant 0 : index
    %0 = vector.load %arg2[%c0, %c0_0, %c0_1] : memref<1x2x32xbf16, #tpu.memory_space<vmem>>, vector<1x2x32xbf16>
    %1 = vector.shape_cast %0 : vector<1x2x32xbf16> to vector<2x32xbf16>
    %c0_2 = arith.constant 0 : index
    %c0_3 = arith.constant 0 : index
    %c0_4 = arith.constant 0 : index
    %2 = vector.load %arg3[%c0_2, %c0_3, %c0_4] : memref<1x32x128xbf16, #tpu.memory_space<vmem>>, vector<1x32x128xbf16>
    %3 = vector.shape_cast %2 : vector<1x32x128xbf16> to vector<32x128xbf16>
    %cst = arith.constant dense<0.000000e+00> : vector<2x128xf32>
    %4 = tpu.matmul %1, %3, %cst {dimension_numbers = #tpu.dot_dimension_numbers<[1], [0], [0], [1], [0, 0, 1, 1], [], []>} : vector<2x32xbf16>, vector<32x128xbf16>, vector<2x128xf32> -> vector<2x128xf32>
    %c0_5 = arith.constant 0 : index
    %c0_6 = arith.constant 0 : index
    %5 = vector.load %arg4[%c0_5, %c0_6] : memref<1x128xf32, #tpu.memory_space<vmem>>, vector<1x128xf32>
    %6 = vector.broadcast %5 : vector<1x128xf32> to vector<2x128xf32>
    %7 = arith.addf %4, %6 : vector<2x128xf32>
    %cst_7 = arith.constant 0.000000e+00 : f32
    %8 = vector.broadcast %cst_7 : f32 to vector<2x128xf32>
    %9 = arith.maximumf %7, %8 : vector<2x128xf32>
    %10 = arith.truncf %9 : vector<2x128xf32> to vector<2x128xbf16>
    %c0_8 = arith.constant 0 : index
    %c0_9 = arith.constant 0 : index
    %c0_10 = arith.constant 0 : index
    %11 = vector.load %arg5[%c0_8, %c0_9, %c0_10] : memref<1x2x128xbf16, #tpu.memory_space<vmem>>, vector<1x2x128xbf16>
    %12 = vector.shape_cast %11 : vector<1x2x128xbf16> to vector<2x128xbf16>
    %13 = vector.shape_cast %10 : vector<2x128xbf16> to vector<1x2x128xbf16>
    tpu.vector_store %arg5[%c0_8, %c0_9, %c0_10], %13 {strides = array<i32>} : memref<1x2x128xbf16, #tpu.memory_space<vmem>>, vector<1x2x128xbf16>,
    return
  }
  func.func @transform_0(%arg0: i32, %arg1: i32) -> (i32, i32, i32) {
    %c0_i32 = arith.constant 0 : i32
    %c0_i32_0 = arith.constant 0 : i32
    %c0_i32_1 = arith.constant 0 : i32
    return %arg0, %c0_i32, %c0_i32_0 : i32, i32, i32
  }
  func.func @transform_1(%arg0: i32, %arg1: i32) -> (i32, i32, i32) {
    %c0_i32 = arith.constant 0 : i32
    %c0_i32_0 = arith.constant 0 : i32
    return %arg0, %c0_i32, %arg1 : i32, i32, i32
  }
  func.func @transform_2(%arg0: i32, %arg1: i32) -> (i32, i32) {
    %c0_i32 = arith.constant 0 : i32
    %c0_i32_0 = arith.constant 0 : i32
    return %c0_i32, %arg1 : i32, i32
  }
  func.func @transform_3(%arg0: i32, %arg1: i32) -> (i32, i32, i32) {
    %c0_i32 = arith.constant 0 : i32
    %c0_i32_0 = arith.constant 0 : i32
    return %arg0, %c0_i32, %arg1 : i32, i32, i32
  }
}

module attributes {stable_mosaic.version = 11 : i64} {
  func.func @_bgemm_kernel(%arg0: i32, %arg1: i32, %arg2: memref<1x8x128xbf16, #tpu.memory_space<vmem>>, %arg3: memref<1x128x16xbf16, #tpu.memory_space<vmem>>, %arg4: memref<8x1xf32, #tpu.memory_space<vmem>>, %arg5: memref<1x8x16xbf16, #tpu.memory_space<vmem>>) attributes {dimension_semantics = [#tpu.dimension_semantics<parallel>, #tpu.dimension_semantics<parallel>], iteration_bounds = array<i64: 8, 1>, scalar_prefetch = 0 : i64, scratch_operands = 0 : i64, tpu.core_type = #tpu.core_type<tc>, window_params = [{transform_indices = @transform_0, window_bounds = array<i64: 1, 8, 128>}, {transform_indices = @transform_1, window_bounds = array<i64: 1, 128, 16>}, {pipeline_mode = #tpu.pipeline_mode<synchronous>, transform_indices = @transform_2, window_bounds = array<i64: 8, 1>}, {transform_indices = @transform_3, window_bounds = array<i64: 1, 8, 16>}]} {
    %c0 = arith.constant 0 : index
    %c0_0 = arith.constant 0 : index
    %c0_1 = arith.constant 0 : index
    %0 = vector.load %arg2[%c0, %c0_0, %c0_1] : memref<1x8x128xbf16, #tpu.memory_space<vmem>>, vector<1x8x128xbf16>
    %1 = vector.shape_cast %0 : vector<1x8x128xbf16> to vector<8x128xbf16>
    %c0_2 = arith.constant 0 : index
    %c0_3 = arith.constant 0 : index
    %c0_4 = arith.constant 0 : index
    %2 = vector.load %arg3[%c0_2, %c0_3, %c0_4] : memref<1x128x16xbf16, #tpu.memory_space<vmem>>, vector<1x128x16xbf16>
    %3 = vector.shape_cast %2 : vector<1x128x16xbf16> to vector<128x16xbf16>
    %cst = arith.constant dense<0.000000e+00> : vector<8x16xf32>
    %4 = tpu.matmul %1, %3, %cst {dimension_numbers = #tpu.dot_dimension_numbers<[1], [0], [0], [1], [0, 0, 1, 1], [], []>} : vector<8x128xbf16>, vector<128x16xbf16>, vector<8x16xf32> -> vector<8x16xf32>
    %c0_5 = arith.constant 0 : index
    %c0_6 = arith.constant 0 : index
    %5 = vector.load %arg4[%c0_5, %c0_6] : memref<8x1xf32, #tpu.memory_space<vmem>>, vector<8x1xf32>
    %6 = vector.broadcast %5 : vector<8x1xf32> to vector<8x16xf32>
    %7 = arith.addf %4, %6 : vector<8x16xf32>
    %cst_7 = arith.constant 0.000000e+00 : f32
    %8 = vector.broadcast %cst_7 : f32 to vector<8x16xf32>
    %9 = arith.maximumf %7, %8 : vector<8x16xf32>
    %10 = arith.truncf %9 : vector<8x16xf32> to vector<8x16xbf16>
    %c0_8 = arith.constant 0 : index
    %c0_9 = arith.constant 0 : index
    %c0_10 = arith.constant 0 : index
    %11 = vector.load %arg5[%c0_8, %c0_9, %c0_10] : memref<1x8x16xbf16, #tpu.memory_space<vmem>>, vector<1x8x16xbf16>
    %12 = vector.shape_cast %11 : vector<1x8x16xbf16> to vector<8x16xbf16>
    %13 = vector.shape_cast %10 : vector<8x16xbf16> to vector<1x8x16xbf16>
    tpu.vector_store %arg5[%c0_8, %c0_9, %c0_10], %13 {strides = array<i32>} : memref<1x8x16xbf16, #tpu.memory_space<vmem>>, vector<1x8x16xbf16>,
    return
  }
  func.func @transform_0(%arg0: i32, %arg1: i32) -> (i32, i32, i32) {
    %c0_i32 = arith.constant 0 : i32
    %c0_i32_0 = arith.constant 0 : i32
    %c0_i32_1 = arith.constant 0 : i32
    return %arg0, %c0_i32, %c0_i32_0 : i32, i32, i32
  }
  func.func @transform_1(%arg0: i32, %arg1: i32) -> (i32, i32, i32) {
    %c0_i32 = arith.constant 0 : i32
    %c0_i32_0 = arith.constant 0 : i32
    return %arg0, %c0_i32, %arg1 : i32, i32, i32
  }
  func.func @transform_2(%arg0: i32, %arg1: i32) -> (i32, i32) {
    %c0_i32 = arith.constant 0 : i32
    %c0_i32_0 = arith.constant 0 : i32
    %c0_i32_1 = arith.constant 0 : i32
    return %c0_i32, %c0_i32_0 : i32, i32
  }
  func.func @transform_3(%arg0: i32, %arg1: i32) -> (i32, i32, i32) {
    %c0_i32 = arith.constant 0 : i32
    %c0_i32_0 = arith.constant 0 : i32
    return %arg0, %c0_i32, %arg1 : i32, i32, i32
  }
}

module attributes {stable_mosaic.version = 11 : i64} {
  func.func @_bgemm_kernel(%arg0: i32, %arg1: i32, %arg2: memref<1x4x64xbf16, #tpu.memory_space<vmem>>, %arg3: memref<1x64x128xbf16, #tpu.memory_space<vmem>>, %arg4: memref<4x1xf32, #tpu.memory_space<vmem>>, %arg5: memref<1x4x128xbf16, #tpu.memory_space<vmem>>) attributes {dimension_semantics = [#tpu.dimension_semantics<parallel>, #tpu.dimension_semantics<parallel>], iteration_bounds = array<i64: 8, 1>, scalar_prefetch = 0 : i64, scratch_operands = 0 : i64, tpu.core_type = #tpu.core_type<tc>, window_params = [{transform_indices = @transform_0, window_bounds = array<i64: 1, 4, 64>}, {transform_indices = @transform_1, window_bounds = array<i64: 1, 64, 128>}, {pipeline_mode = #tpu.pipeline_mode<synchronous>, transform_indices = @transform_2, window_bounds = array<i64: 4, 1>}, {transform_indices = @transform_3, window_bounds = array<i64: 1, 4, 128>}]} {
    %c0 = arith.constant 0 : index
    %c0_0 = arith.constant 0 : index
    %c0_1 = arith.constant 0 : index
    %0 = vector.load %arg2[%c0, %c0_0, %c0_1] : memref<1x4x64xbf16, #tpu.memory_space<vmem>>, vector<1x4x64xbf16>
    %1 = vector.shape_cast %0 : vector<1x4x64xbf16> to vector<4x64xbf16>
    %c0_2 = arith.constant 0 : index
    %c0_3 = arith.constant 0 : index
    %c0_4 = arith.constant 0 : index
    %2 = vector.load %arg3[%c0_2, %c0_3, %c0_4] : memref<1x64x128xbf16, #tpu.memory_space<vmem>>, vector<1x64x128xbf16>
    %3 = vector.shape_cast %2 : vector<1x64x128xbf16> to vector<64x128xbf16>
    %cst = arith.constant dense<0.000000e+00> : vector<4x128xf32>
    %4 = tpu.matmul %1, %3, %cst {dimension_numbers = #tpu.dot_dimension_numbers<[1], [0], [0], [1], [0, 0, 1, 1], [], []>} : vector<4x64xbf16>, vector<64x128xbf16>, vector<4x128xf32> -> vector<4x128xf32>
    %c0_5 = arith.constant 0 : index
    %c0_6 = arith.constant 0 : index
    %5 = vector.load %arg4[%c0_5, %c0_6] : memref<4x1xf32, #tpu.memory_space<vmem>>, vector<4x1xf32>
    %6 = vector.broadcast %5 : vector<4x1xf32> to vector<4x128xf32>
    %7 = arith.addf %4, %6 : vector<4x128xf32>
    %cst_7 = arith.constant 0.000000e+00 : f32
    %8 = vector.broadcast %cst_7 : f32 to vector<4x128xf32>
    %9 = arith.maximumf %7, %8 : vector<4x128xf32>
    %10 = arith.truncf %9 : vector<4x128xf32> to vector<4x128xbf16>
    %c0_8 = arith.constant 0 : index
    %c0_9 = arith.constant 0 : index
    %c0_10 = arith.constant 0 : index
    %11 = vector.load %arg5[%c0_8, %c0_9, %c0_10] : memref<1x4x128xbf16, #tpu.memory_space<vmem>>, vector<1x4x128xbf16>
    %12 = vector.shape_cast %11 : vector<1x4x128xbf16> to vector<4x128xbf16>
    %13 = vector.shape_cast %10 : vector<4x128xbf16> to vector<1x4x128xbf16>
    tpu.vector_store %arg5[%c0_8, %c0_9, %c0_10], %13 {strides = array<i32>} : memref<1x4x128xbf16, #tpu.memory_space<vmem>>, vector<1x4x128xbf16>,
    return
  }
  func.func @transform_0(%arg0: i32, %arg1: i32) -> (i32, i32, i32) {
    %c0_i32 = arith.constant 0 : i32
    %c0_i32_0 = arith.constant 0 : i32
    %c0_i32_1 = arith.constant 0 : i32
    return %arg0, %c0_i32, %c0_i32_0 : i32, i32, i32
  }
  func.func @transform_1(%arg0: i32, %arg1: i32) -> (i32, i32, i32) {
    %c0_i32 = arith.constant 0 : i32
    %c0_i32_0 = arith.constant 0 : i32
    return %arg0, %c0_i32, %arg1 : i32, i32, i32
  }
  func.func @transform_2(%arg0: i32, %arg1: i32) -> (i32, i32) {
    %c0_i32 = arith.constant 0 : i32
    %c0_i32_0 = arith.constant 0 : i32
    %c0_i32_1 = arith.constant 0 : i32
    return %c0_i32, %c0_i32_0 : i32, i32
  }
  func.func @transform_3(%arg0: i32, %arg1: i32) -> (i32, i32, i32) {
    %c0_i32 = arith.constant 0 : i32
    %c0_i32_0 = arith.constant 0 : i32
    return %arg0, %c0_i32, %arg1 : i32, i32, i32
  }
}

module attributes {stable_mosaic.version = 11 : i64} {
  func.func @_bgemm_kernel(%arg0: i32, %arg1: i32, %arg2: memref<1x3x108xbf16, #tpu.memory_space<vmem>>, %arg3: memref<1x108x512xbf16, #tpu.memory_space<vmem>>, %arg4: memref<3x1xf32, #tpu.memory_space<vmem>>, %arg5: memref<1x3x512xf32, #tpu.memory_space<vmem>>) attributes {dimension_semantics = [#tpu.dimension_semantics<parallel>, #tpu.dimension_semantics<parallel>], iteration_bounds = array<i64: 1, 2>, scalar_prefetch = 0 : i64, scratch_operands = 0 : i64, tpu.core_type = #tpu.core_type<tc>, window_params = [{transform_indices = @transform_0, window_bounds = array<i64: 1, 3, 108>}, {transform_indices = @transform_1, window_bounds = array<i64: 1, 108, 512>}, {pipeline_mode = #tpu.pipeline_mode<synchronous>, transform_indices = @transform_2, window_bounds = array<i64: 3, 1>}, {transform_indices = @transform_3, window_bounds = array<i64: 1, 3, 512>}]} {
    %c0 = arith.constant 0 : index
    %c0_0 = arith.constant 0 : index
    %c0_1 = arith.constant 0 : index
    %0 = vector.load %arg2[%c0, %c0_0, %c0_1] : memref<1x3x108xbf16, #tpu.memory_space<vmem>>, vector<1x3x108xbf16>
    %1 = vector.shape_cast %0 : vector<1x3x108xbf16> to vector<3x108xbf16>
    %c0_2 = arith.constant 0 : index
    %c0_3 = arith.constant 0 : index
    %c0_4 = arith.constant 0 : index
    %2 = vector.load %arg3[%c0_2, %c0_3, %c0_4] : memref<1x108x512xbf16, #tpu.memory_space<vmem>>, vector<1x108x512xbf16>
    %3 = vector.shape_cast %2 : vector<1x108x512xbf16> to vector<108x512xbf16>
    %cst = arith.constant dense<0.000000e+00> : vector<3x512xf32>
    %4 = tpu.matmul %1, %3, %cst {dimension_numbers = #tpu.dot_dimension_numbers<[1], [0], [0], [1], [0, 0, 1, 1], [], []>} : vector<3x108xbf16>, vector<108x512xbf16>, vector<3x512xf32> -> vector<3x512xf32>
    %c0_5 = arith.constant 0 : index
    %c0_6 = arith.constant 0 : index
    %5 = vector.load %arg4[%c0_5, %c0_6] : memref<3x1xf32, #tpu.memory_space<vmem>>, vector<3x1xf32>
    %6 = vector.broadcast %5 : vector<3x1xf32> to vector<3x512xf32>
    %7 = arith.addf %4, %6 : vector<3x512xf32>
    %c0_7 = arith.constant 0 : index
    %c0_8 = arith.constant 0 : index
    %c0_9 = arith.constant 0 : index
    %8 = vector.load %arg5[%c0_7, %c0_8, %c0_9] : memref<1x3x512xf32, #tpu.memory_space<vmem>>, vector<1x3x512xf32>
    %9 = vector.shape_cast %8 : vector<1x3x512xf32> to vector<3x512xf32>
    %10 = vector.shape_cast %7 : vector<3x512xf32> to vector<1x3x512xf32>
    tpu.vector_store %arg5[%c0_7, %c0_8, %c0_9], %10 {strides = array<i32>} : memref<1x3x512xf32, #tpu.memory_space<vmem>>, vector<1x3x512xf32>,
    return
  }
  func.func @transform_0(%arg0: i32, %arg1: i32) -> (i32, i32, i32) {
    %c0_i32 = arith.constant 0 : i32
    %c0_i32_0 = arith.constant 0 : i32
    %c0_i32_1 = arith.constant 0 : i32
    return %arg0, %c0_i32, %c0_i32_0 : i32, i32, i32
  }
  func.func @transform_1(%arg0: i32, %arg1: i32) -> (i32, i32, i32) {
    %c0_i32 = arith.constant 0 : i32
    %c0_i32_0 = arith.constant 0 : i32
    return %arg0, %c0_i32, %arg1 : i32, i32, i32
  }
  func.func @transform_2(%arg0: i32, %arg1: i32) -> (i32, i32) {
    %c0_i32 = arith.constant 0 : i32
    %c0_i32_0 = arith.constant 0 : i32
    %c0_i32_1 = arith.constant 0 : i32
    return %c0_i32, %c0_i32_0 : i32, i32
  }
  func.func @transform_3(%arg0: i32, %arg1: i32) -> (i32, i32, i32) {
    %c0_i32 = arith.constant 0 : i32
    %c0_i32_0 = arith.constant 0 : i32
    return %arg0, %c0_i32, %arg1 : i32, i32, i32
  }
}

</mosaic_0001>

<llo_original>
// kernel: state_decoder_forward.4
$region0: #{state_decoder_forward.4}
  #allocation0 [shape = 'u32[]', space=smem, size = 0x4, offset = 0x4, fixed_abs, tag = 'smem constant byte address 0x4 - core index']
  #allocation1 [shape = 'u32[144,128]{1,0:T(1,128)}', space=vmem, size = 0x12000, scoped, tag = 'internal scratch']
  %s0 = inlined_call_operand.vmem [shape: bf16[1,2,32], index: 0, kind: input, shape index: {}]
  %s1 = inlined_call_operand.hbm [shape: bf16[1,32,128], index: 1, kind: input, shape index: {}]
  %s2 = inlined_call_operand.hbm [shape: f32[1,128], index: 2, kind: input, shape index: {}]
  %s3 = inlined_call_operand.vmem [shape: bf16[1,2,128], index: 3, kind: output, shape index: {}]
  %s4 = sld [smem:[#allocation0]]
  $region30: #{state_decoder_forward.4} parent=0
    _
  %s6 = ssub.s32 1, %s4
  %s7 = scalar_select 0, %s6, %s4
  $region1: #{state_decoder_forward.4} parent=0
    #allocation2 [shape = 'u8[8192]{0}', space=vmem, size = 0x2000, scoped, tag = 'input window, operand 1, single buffered']
    #allocation3 [shape = 's32[1]{0}', space=sflag, size = 0x4, scoped, tag = 'scoped memory for state_decoder_forward.4']
    #allocation4 [shape = 'u8[512]{0}', space=vmem, size = 0x400, scoped, tag = 'input window, operand 2, single buffered']
    #allocation5 [shape = 's32[1]{0}', space=sflag, size = 0x4, scoped, tag = 'scoped memory for state_decoder_forward.4']
    %8 = vsyncpa [#allocation3], 0
    %9 = vsyncpa [#allocation5], 0
    // Predicated region
    $region2: #{state_decoder_forward.4} parent=1 // pred_check
      _
    $region3: #{state_decoder_forward.4} parent=1 // pred_check_branch
      %11 = sbr.rel (0) target = $region5
    $region4: #{state_decoder_forward.4} parent=1 // pred_region
      _
    $region5: #{state_decoder_forward.4} parent=1 // pred_fallthru
      _
    // Predicated region
    $region6: #{state_decoder_forward.4} parent=1 // pred_check
      _
    $region7: #{state_decoder_forward.4} parent=1 // pred_check_branch
      %13 = sbr.rel (0) target = $region9
    $region8: #{state_decoder_forward.4} parent=1 // pred_region
      %s15 = ssub.s32 256, 256
      %16 = vsyncadd [#allocation3], %s15
      %s17 = sshll.u32 [#allocation2], 4
      %s18 = int_to_ptr.vmem [resolvable:$true] %s17
      %23 = dma.hbm_to_vmem [thread:$0]  %s1, 256, %s18, [#allocation3], 64, 64, 4
    $region9: #{state_decoder_forward.4} parent=1 // pred_fallthru
      _
    // Predicated region
    $region10: #{state_decoder_forward.4} parent=1 // pred_check
      _
    $region11: #{state_decoder_forward.4} parent=1 // pred_check_branch
      %25 = sbr.rel (0) target = $region13
    $region12: #{state_decoder_forward.4} parent=1 // pred_region
      %s27 = ssub.s32 16, 16
      %28 = vsyncadd [#allocation5], %s27
      %s30 = sshll.u32 [#allocation4], 4
      %s31 = int_to_ptr.vmem [resolvable:$true] %s30
      %33 = dma.hbm_to_vmem [thread:$0]  %s2, 16, %s31, [#allocation5]
    $region13: #{state_decoder_forward.4} parent=1 // pred_fallthru
      _
    // Predicated region
    $region14: #{state_decoder_forward.4} parent=1 // pred_check
      _
    $region15: #{state_decoder_forward.4} parent=1 // pred_check_branch
      %35 = sbr.rel (0) target = $region17
    $region16: #{state_decoder_forward.4} parent=1 // pred_region
      %36 = dma.done [#allocation3], 256
    $region17: #{state_decoder_forward.4} parent=1 // pred_fallthru
      _
    // Predicated region
    $region18: #{state_decoder_forward.4} parent=1 // pred_check
      _
    $region19: #{state_decoder_forward.4} parent=1 // pred_check_branch
      %38 = sbr.rel (0) target = $region21
    $region20: #{state_decoder_forward.4} parent=1 // pred_region
      %39 = dma.done [#allocation5], 16
    $region21: #{state_decoder_forward.4} parent=1 // pred_fallthru
      _
    %v41 = vld [vmem:[%s0] sm:$0x1]
    %v42 = vld [vmem:[#allocation2] sm:$0xf]
    %v43 = vld [vmem:[#allocation2 + $0x4] sm:$0xf]
    %v44 = vld [vmem:[#allocation2 + $0x8] sm:$0xf]
    %v45 = vld [vmem:[#allocation2 + $0xc] sm:$0xf]
    %v46 = vld [vmem:[#allocation4] sm:$0x1]
    %v48 = vlaneseq
    %v49 = vshrl.u32 %v48, 7
    %v50 = vsub.s32 0, %v49
    %v51 = vrot.slane %v46, %v50
    %v57 = vunpack.c.l.b16 %v42
    %v58 = vunpack.c.l.b16 %v43
    %v59 = vunpack.c.l.b16 %v44
    %v60 = vunpack.c.l.b16 %v45
    %v61 = vpack.c.b16 %v58, %v57
    %v62 = vpack.c.b16 %v60, %v59
    %vm65 = vcmask 261120
    %v67 = vsel %vm65, %v41, 0
    %69 = vmatprep.subr.bf16.mxu0 0
    %70 = vmatpush1.bf16.msra.mxu0 %v61
    %71 = vmatprep.subr.bf16.mxu0 0
    %72 = vmatpush1.bf16.msra.mxu0 %v62
    %73 = vmatprep.subr.bf16.mxu0 0
    %74 = vmatpush1.bf16.msra.mxu0 0
    %75 = vmatprep.subr.bf16.mxu0 0
    %76 = vmatpush1.bf16.msra.mxu0 0
    %77 = vmatprep.subr.bf16.mxu0 0
    %78 = vmatpush1.bf16.msra.mxu0 0
    %79 = vmatprep.subr.bf16.mxu0 0
    %80 = vmatpush1.bf16.msra.mxu0 0
    %81 = vmatprep.subr.bf16.mxu0 0
    %82 = vmatpush1.bf16.msra.mxu0 0
    %83 = vmatprep.subr.bf16.mxu0 0
    %84 = vmatpush1.bf16.msra.mxu0 0
    %85 = vmatprep.subr.bf16.mxu0 0
    %86 = vmatpush1.bf16.msra.mxu0 0
    %87 = vmatprep.subr.bf16.mxu0 0
    %88 = vmatpush1.bf16.msra.mxu0 0
    %89 = vmatprep.subr.bf16.mxu0 0
    %90 = vmatpush1.bf16.msra.mxu0 0
    %91 = vmatprep.subr.bf16.mxu0 0
    %92 = vmatpush1.bf16.msra.mxu0 0
    %93 = vmatprep.subr.bf16.mxu0 0
    %94 = vmatpush1.bf16.msra.mxu0 0
    %95 = vmatprep.subr.bf16.mxu0 0
    %96 = vmatpush1.bf16.msra.mxu0 0
    %97 = vmatprep.subr.bf16.mxu0 0
    %98 = vmatpush1.bf16.msra.mxu0 0
    %99 = vmatprep.subr.bf16.mxu0 0
    %100 = vmatpush1.bf16.msra.mxu0 0
    %101 = vmatprep.mubr.bf16.mxu0 0
    %102 = vmatmul.mubr.bf16.gmra.mrb[0].mxu0 %v67
    %v103 = vpop.f32.mrb[0].mxu0
    %v104 = vadd.f32 %v51, %v103
    %v105 = vpop.f32.mrb[0].mxu0
    %v106 = vpop.f32.mrb[0].mxu0
    %v107 = vpop.f32.mrb[0].mxu0
    %108 = vdwg.mxu0
    %v109 = vmax.f32 %v104, 0.0
    %v110 = vpack.c.bf16 %v109, %v109
    %111 = vst [vmem:[%s3] sm:$0x1] %v110
    // Predicated region
    $region22: #{state_decoder_forward.4} parent=1 // pred_check
      _
    $region23: #{state_decoder_forward.4} parent=1 // pred_check_branch
      %113 = sbr.rel (0) target = $region25
    $region24: #{state_decoder_forward.4} parent=1 // pred_region
      _
    $region25: #{state_decoder_forward.4} parent=1 // pred_fallthru
      _
    // Predicated region
    $region26: #{state_decoder_forward.4} parent=1 // pred_check
      _
    $region27: #{state_decoder_forward.4} parent=1 // pred_check_branch
      %115 = sbr.rel (0) target = $region29
    $region28: #{state_decoder_forward.4} parent=1 // pred_region
      _
    $region29: #{state_decoder_forward.4} parent=1 // pred_fallthru
      _
    %116 = vsyncpa [#allocation3], 1
    %117 = vsyncpa [#allocation5], 1

// kernel: state_decoder_forward.5
$region0: #{state_decoder_forward.5}
  #allocation0 [shape = 'u32[]', space=smem, size = 0x4, offset = 0x4, fixed_abs, tag = 'smem constant byte address 0x4 - core index']
  #allocation1 [shape = 'u32[144,128]{1,0:T(1,128)}', space=vmem, size = 0x12000, scoped, tag = 'internal scratch']
  %s0 = inlined_call_operand.hbm [shape: bf16[8,8,128], index: 0, kind: input, shape index: {}]
  %s1 = inlined_call_operand.vmem [shape: bf16[8,128,16], index: 1, kind: input, shape index: {}]
  %s2 = inlined_call_operand.vmem [shape: f32[8,1], index: 2, kind: input, shape index: {}]
  %s3 = inlined_call_operand.vmem [shape: bf16[8,8,16], index: 3, kind: output, shape index: {}]
  %s4 = sld [smem:[#allocation0]]
  $region49: #{state_decoder_forward.5} parent=0
    _
  %s6 = ssub.s32 1, %s4
  %s7 = scalar_select 0, %s6, %s4
  $region1: #{state_decoder_forward.5} parent=0
    #allocation2 [shape = 'u8[4096]{0}', space=vmem, size = 0x1000, scoped, tag = 'input window, operand 0']
    #allocation3 [shape = 's32[2]{0}', space=sflag, size = 0x8, scoped, tag = 'scoped memory for state_decoder_forward.5']
    %8 = vsyncpa [#allocation3], 0
    %s9 = scalar_lea.sflag [#allocation3], 1
    %10 = vsyncpa %s9, 0
    loop: start=0, step=1, limit=10
    $region2: #{state_decoder_forward.5} parent=1 // loop_pre_header
      _
    $region3: #{state_decoder_forward.5} parent=1 // loop_header
      %s12 = sphi 0, %s16
      %p13 = scmp.ge.s32.totalorder %s12, 10
      %s19 = sphi 0, %s31
      %s20 = sphi 0, %s27
      %s21 = sphi 0, %s19
      %s22 = sphi 0, %s20
      %s23 = sphi 0, %s21
      %s24 = sphi 0, %s22
      %s34 = sphi 0, %s36
      %s37 = sphi 0, %s34
      %s38 = sphi 0, %s37
      %s54 = sphi 0, %s38
      %s62 = sphi 0, %s64
      %s65 = sphi 0, %s62
      %s66 = sphi 0, %s65
      %s82 = sphi 0, %s66
      %s86 = sphi 0, %s86
      %s88 = sphi 0, %s86
      %s89 = sphi 0, %s88
      %s103 = sphi 0, %s89
      %s111 = sphi 0, %s113
      %s114 = sphi 0, %s111
      %s115 = sphi 0, %s114
      %s131 = sphi 0, %s115
    $region4: #{state_decoder_forward.5} parent=1 // loop_header_branch
      %15 = sbr.rel (%p13) target = $region8
    $region5: #{state_decoder_forward.5} parent=1 // loop_body
      %s17 = ssub.s32 %s12, 1
      %s18 = ssub.s32 %s12, 2
      %s25 = sadd.s32 1, %s20
      %p26 = scmp.ge.s32.totalorder %s25, 1
      %s27 = scalar_select %p26, 0, %s25
      %s28 = sadd.s32 1, %s19
      %s29 = scalar_select %p26, %s28, %s19
      %p30 = scmp.ge.s32.totalorder %s29, 8
      %s31 = scalar_select %p30, 0, %s29
      %s32 = ssub.s32 %s19, %s31
      %p33 = scmp.eq.s32.totalorder %s32, 0
      %s35 = sadd.s32 %s34, 1
      %s36 = scalar_select %p33, %s34, %s35
      %p39 = pneg %p33
      %p40 = scmp.eq.s32.totalorder %s12, 7
      %p41 = por %p39, %p40
      %p42 = scmp.ne.s32.totalorder %s34, %s37
      %p43 = scmp.eq.s32.totalorder %s12, 0
      %p44 = por %p42, %p43
      %p45 = scmp.ne.s32.totalorder %s34, %s37
      %p46 = scmp.eq.s32.totalorder %s17, 7
      %p47 = por %p45, %p46
      %p48 = scmp.ne.s32.totalorder %s37, %s38
      %p49 = scmp.eq.s32.totalorder %s17, 0
      %p50 = por %p48, %p49
      %p51 = scmp.ne.s32.totalorder %s37, %s38
      %p52 = scmp.eq.s32.totalorder %s18, 7
      %p53 = por %p51, %p52
      %p55 = scmp.ne.s32.totalorder %s38, %s54
      %p56 = scmp.eq.s32.totalorder %s18, 0
      %p57 = por %p55, %p56
      %s58 = ssub.s32 %s19, %s31
      %s59 = ssub.s32 %s20, %s27
      %s60 = sor.u32 %s58, %s59
      %p61 = scmp.eq.s32.totalorder %s60, 0
      %s63 = sadd.s32 %s62, 1
      %s64 = scalar_select %p61, %s62, %s63
      %p67 = pneg %p61
      %p68 = scmp.eq.s32.totalorder %s12, 7
      %p69 = por %p67, %p68
      %p70 = scmp.ne.s32.totalorder %s62, %s65
      %p71 = scmp.eq.s32.totalorder %s12, 0
      %p72 = por %p70, %p71
      %p73 = scmp.ne.s32.totalorder %s62, %s65
      %p74 = scmp.eq.s32.totalorder %s17, 7
      %p75 = por %p73, %p74
      %p76 = scmp.ne.s32.totalorder %s65, %s66
      %p77 = scmp.eq.s32.totalorder %s17, 0
      %p78 = por %p76, %p77
      %p79 = scmp.ne.s32.totalorder %s65, %s66
      %p80 = scmp.eq.s32.totalorder %s18, 7
      %p81 = por %p79, %p80
      %p83 = scmp.ne.s32.totalorder %s66, %s82
      %p84 = scmp.eq.s32.totalorder %s18, 0
      %p85 = por %p83, %p84
      %s87 = sadd.s32 %s86, 1
      %p90 = scmp.eq.s32.totalorder %s12, 7
      %p91 = scmp.ne.s32.totalorder %s86, %s88
      %p92 = scmp.eq.s32.totalorder %s12, 0
      %p93 = por %p91, %p92
      %p94 = scmp.ne.s32.totalorder %s86, %s88
      %p95 = scmp.eq.s32.totalorder %s17, 7
      %p96 = por %p94, %p95
      %p97 = scmp.ne.s32.totalorder %s88, %s89
      %p98 = scmp.eq.s32.totalorder %s17, 0
      %p99 = por %p97, %p98
      %p100 = scmp.ne.s32.totalorder %s88, %s89
      %p101 = scmp.eq.s32.totalorder %s18, 7
      %p102 = por %p100, %p101
      %p104 = scmp.ne.s32.totalorder %s89, %s103
      %p105 = scmp.eq.s32.totalorder %s18, 0
      %p106 = por %p104, %p105
      %s107 = ssub.s32 %s19, %s31
      %s108 = ssub.s32 %s20, %s27
      %s109 = sor.u32 %s107, %s108
      %p110 = scmp.eq.s32.totalorder %s109, 0
      %s112 = sadd.s32 %s111, 1
      %s113 = scalar_select %p110, %s111, %s112
      %p116 = pneg %p110
      %p117 = scmp.eq.s32.totalorder %s12, 7
      %p118 = por %p116, %p117
      %p119 = scmp.ne.s32.totalorder %s111, %s114
      %p120 = scmp.eq.s32.totalorder %s12, 0
      %p121 = por %p119, %p120
      %p122 = scmp.ne.s32.totalorder %s111, %s114
      %p123 = scmp.eq.s32.totalorder %s17, 7
      %p124 = por %p122, %p123
      %p125 = scmp.ne.s32.totalorder %s114, %s115
      %p126 = scmp.eq.s32.totalorder %s17, 0
      %p127 = por %p125, %p126
      %p128 = scmp.ne.s32.totalorder %s114, %s115
      %p129 = scmp.eq.s32.totalorder %s18, 7
      %p130 = por %p128, %p129
      %p132 = scmp.ne.s32.totalorder %s115, %s131
      %p133 = scmp.eq.s32.totalorder %s18, 0
      %p134 = por %p132, %p133
      %p135 = scmp.le.s32.totalorder 1, %s12
      %p136 = scmp.lt.s32.totalorder %s12, 9
      %p137 = pnand %p135, %p136
      %p138 = pneg %p137
      // Predicated region
      $region9: #{state_decoder_forward.5} parent=5 // pred_check
        _
      $region10: #{state_decoder_forward.5} parent=5 // pred_check_branch
        %140 = sbr.rel (%p137) target = $region12
      $region11: #{state_decoder_forward.5} parent=5 // pred_region
        %s141 = ssub.s32 %s12, 1
        // Predicated region
        $region13: #{state_decoder_forward.5} parent=11 // pred_check
          %p142 = pneg %p99
        $region14: #{state_decoder_forward.5} parent=11 // pred_check_branch
          %144 = sbr.rel (%p142) target = $region16
        $region15: #{state_decoder_forward.5} parent=11 // pred_region
          _
        $region16: #{state_decoder_forward.5} parent=11 // pred_fallthru
          _
      $region12: #{state_decoder_forward.5} parent=5 // pred_fallthru
        _
      %p145 = scmp.lt.s32.totalorder %s12, 8
      // Predicated region
      $region17: #{state_decoder_forward.5} parent=5 // pred_check
        %p146 = pneg %p145
      $region18: #{state_decoder_forward.5} parent=5 // pred_check_branch
        %148 = sbr.rel (%p146) target = $region20
      $region19: #{state_decoder_forward.5} parent=5 // pred_region
        // Predicated region
        $region21: #{state_decoder_forward.5} parent=19 // pred_check
          %p149 = pneg %p44
        $region22: #{state_decoder_forward.5} parent=19 // pred_check_branch
          %151 = sbr.rel (%p149) target = $region24
        $region23: #{state_decoder_forward.5} parent=19 // pred_region
          %s152 = sand.u32 %s34, 1
          %s153 = scalar_lea.sflag [#allocation3], %s152
          %s154 = sand.u32 %s34, 1
          %s155 = smul.addr %s154, 4
          %s156 = scalar_lea.vmem [#allocation2], %s155
          %s158 = ssub.s32 64, 64
          %159 = vsyncadd %s153, %s158
          %s160 = smul.addr %s19, 64
          %s161 = scalar_lea.hbm %s0, %s160
          %s163 = sshll.u32 %s156, 4
          %s164 = int_to_ptr.vmem [resolvable:$true] %s163
          %166 = dma.hbm_to_vmem [thread:$0]  %s161, 64, %s164, %s153
        $region24: #{state_decoder_forward.5} parent=19 // pred_fallthru
          _
        // Predicated region
        $region25: #{state_decoder_forward.5} parent=19 // pred_check
          %p167 = pneg %p72
        $region26: #{state_decoder_forward.5} parent=19 // pred_check_branch
          %169 = sbr.rel (%p167) target = $region28
        $region27: #{state_decoder_forward.5} parent=19 // pred_region
          %p170 = scmp.lt.s32.totalorder %s19, 7
          %s171 = scalar_select %p170, %s19, 7
          %p172 = scmp.lt.s32.totalorder %s20, 0
          %s173 = scalar_select %p172, %s20, 0
          %s174 = smul.addr %s171, 16
          %s175 = sadd.s32 %s173, %s174
          %s176 = smul.addr %s175, 4
          %s177 = scalar_lea.vmem %s1, %s176
        $region28: #{state_decoder_forward.5} parent=19 // pred_fallthru
          _
      $region20: #{state_decoder_forward.5} parent=5 // pred_fallthru
        _
      %p178 = scmp.le.s32.totalorder 1, %s12
      %p179 = scmp.lt.s32.totalorder %s12, 9
      %p180 = pnand %p178, %p179
      %p181 = pneg %p180
      // Predicated region
      $region29: #{state_decoder_forward.5} parent=5 // pred_check
        _
      $region30: #{state_decoder_forward.5} parent=5 // pred_check_branch
        %183 = sbr.rel (%p180) target = $region32
      $region31: #{state_decoder_forward.5} parent=5 // pred_region
        %s184 = ssub.s32 %s12, 1
        %s185 = sand.u32 %s37, 1
        %s186 = scalar_lea.sflag [#allocation3], %s185
        %s187 = sand.u32 %s37, 1
        %s188 = smul.addr %s187, 4
        %s189 = scalar_lea.vmem [#allocation2], %s188
        // Predicated region
        $region33: #{state_decoder_forward.5} parent=31 // pred_check
          %p190 = pneg %p50
        $region34: #{state_decoder_forward.5} parent=31 // pred_check_branch
          %192 = sbr.rel (%p190) target = $region36
        $region35: #{state_decoder_forward.5} parent=31 // pred_region
          %193 = dma.done %s186, 64
        $region36: #{state_decoder_forward.5} parent=31 // pred_fallthru
          _
        %s194 = sand.u32 %s37, 1
        %s195 = scalar_lea.sflag [#allocation3], %s194
        %s196 = sand.u32 %s37, 1
        %s197 = smul.addr %s196, 4
        %s198 = scalar_lea.vmem [#allocation2], %s197
        %p199 = pneg %p50
        %p200 = pneg %p47
        %p201 = scmp.lt.s32.totalorder %s21, 7
        %s202 = scalar_select %p201, %s21, 7
        %p203 = scmp.lt.s32.totalorder %s22, 0
        %s204 = scalar_select %p203, %s22, 0
        %s205 = smul.addr %s202, 16
        %s206 = sadd.s32 %s204, %s205
        %s207 = smul.addr %s206, 4
        %s208 = scalar_lea.vmem %s1, %s207
        %p209 = pneg %p78
        %p210 = pneg %p75
        %p211 = pneg %p99
        %p212 = pneg %p96
        %p213 = pneg %p127
        %p214 = pneg %p124
        %p215 = scmp.lt.s32.totalorder %s21, 7
        %s216 = scalar_select %p215, %s21, 7
        %p217 = scmp.lt.s32.totalorder %s22, 0
        %s218 = scalar_select %p217, %s22, 0
        %s219 = sadd.s32 %s218, %s216
        %s220 = smul.addr %s219, 4
        %s221 = scalar_lea.vmem %s3, %s220
        %p222 = scmp.lt.s32.totalorder %s21, 7
        %s223 = scalar_select %p222, %s21, 7
        %p224 = scmp.lt.s32.totalorder %s22, 0
        %s225 = scalar_select %p224, %s22, 0
        %s226 = smul.addr %s223, 16
        %s227 = sadd.s32 %s225, %s226
        %s228 = smul.addr %s227, 4
        %s229 = scalar_lea.vmem %s1, %s228
        %p230 = scmp.lt.s32.totalorder %s21, 7
        %s231 = scalar_select %p230, %s21, 7
        %p232 = scmp.lt.s32.totalorder %s22, 0
        %s233 = scalar_select %p232, %s22, 0
        %s234 = sadd.s32 %s233, %s231
        %s235 = smul.addr %s234, 4
        %s236 = scalar_lea.vmem %s3, %s235
        %v238 = vld [vmem:[%s189] sm:$0xf]
        %v239 = vld [vmem:[%s229] sm:$0xf]
        %v240 = vld [vmem:[%s229 + $0x4] sm:$0xf]
        %v241 = vld [vmem:[%s229 + $0x8] sm:$0xf]
        %v242 = vld [vmem:[%s229 + $0xc] sm:$0xf]
        %v243 = vld [vmem:[%s229 + $0x10] sm:$0xf]
        %v244 = vld [vmem:[%s229 + $0x14] sm:$0xf]
        %v245 = vld [vmem:[%s229 + $0x18] sm:$0xf]
        %v246 = vld [vmem:[%s229 + $0x1c] sm:$0xf]
        %v247 = vld [vmem:[%s229 + $0x20] sm:$0xf]
        %v248 = vld [vmem:[%s229 + $0x24] sm:$0xf]
        %v249 = vld [vmem:[%s229 + $0x28] sm:$0xf]
        %v250 = vld [vmem:[%s229 + $0x2c] sm:$0xf]
        %v251 = vld [vmem:[%s229 + $0x30] sm:$0xf]
        %v252 = vld [vmem:[%s229 + $0x34] sm:$0xf]
        %v253 = vld [vmem:[%s229 + $0x38] sm:$0xf]
        %v254 = vld [vmem:[%s229 + $0x3c] sm:$0xf]
        %v255 = vld [vmem:[%s2] sm:$0xff]
        %257 = vset.pattern.permute.xlu0 0
        %258 = vperm.xlu0 %257, %v255
        %v259 = vpop.permute.xlu0 %258
        %v277 = vunpack.c.l.b16 %v239
        %v278 = vunpack.c.l.b16 %v240
        %v279 = vunpack.c.l.b16 %v241
        %v280 = vunpack.c.l.b16 %v242
        %v281 = vunpack.c.l.b16 %v243
        %v282 = vunpack.c.l.b16 %v244
        %v283 = vunpack.c.l.b16 %v245
        %v284 = vunpack.c.l.b16 %v246
        %v285 = vunpack.c.l.b16 %v247
        %v286 = vunpack.c.l.b16 %v248
        %v287 = vunpack.c.l.b16 %v249
        %v288 = vunpack.c.l.b16 %v250
        %v289 = vunpack.c.l.b16 %v251
        %v290 = vunpack.c.l.b16 %v252
        %v291 = vunpack.c.l.b16 %v253
        %v292 = vunpack.c.l.b16 %v254
        %v293 = vpack.c.b16 %v278, %v277
        %v294 = vpack.c.b16 %v280, %v279
        %v295 = vpack.c.b16 %v282, %v281
        %v296 = vpack.c.b16 %v284, %v283
        %v297 = vpack.c.b16 %v286, %v285
        %v298 = vpack.c.b16 %v288, %v287
        %v299 = vpack.c.b16 %v290, %v289
        %v300 = vpack.c.b16 %v292, %v291
        %309 = vmatprep.subr.bf16.mxu0 0
        %310 = vmatpush1.bf16.msra.mxu0 %v293
        %311 = vmatprep.subr.bf16.mxu0 0
        %312 = vmatpush1.bf16.msra.mxu0 %v294
        %313 = vmatprep.subr.bf16.mxu0 0
        %314 = vmatpush1.bf16.msra.mxu0 %v295
        %315 = vmatprep.subr.bf16.mxu0 0
        %316 = vmatpush1.bf16.msra.mxu0 %v296
        %317 = vmatprep.subr.bf16.mxu0 0
        %318 = vmatpush1.bf16.msra.mxu0 %v297
        %319 = vmatprep.subr.bf16.mxu0 0
        %320 = vmatpush1.bf16.msra.mxu0 %v298
        %321 = vmatprep.subr.bf16.mxu0 0
        %322 = vmatpush1.bf16.msra.mxu0 %v299
        %323 = vmatprep.subr.bf16.mxu0 0
        %324 = vmatpush1.bf16.msra.mxu0 %v300
        %325 = vmatprep.subr.bf16.mxu0 0
        %326 = vmatpush1.bf16.msra.mxu0 0
        %327 = vmatprep.subr.bf16.mxu0 0
        %328 = vmatpush1.bf16.msra.mxu0 0
        %329 = vmatprep.subr.bf16.mxu0 0
        %330 = vmatpush1.bf16.msra.mxu0 0
        %331 = vmatprep.subr.bf16.mxu0 0
        %332 = vmatpush1.bf16.msra.mxu0 0
        %333 = vmatprep.subr.bf16.mxu0 0
        %334 = vmatpush1.bf16.msra.mxu0 0
        %335 = vmatprep.subr.bf16.mxu0 0
        %336 = vmatpush1.bf16.msra.mxu0 0
        %337 = vmatprep.subr.bf16.mxu0 0
        %338 = vmatpush1.bf16.msra.mxu0 0
        %339 = vmatprep.subr.bf16.mxu0 0
        %340 = vmatpush1.bf16.msra.mxu0 0
        %341 = vmatprep.mubr.bf16.mxu0 0
        %342 = vmatmul.mubr.bf16.gmra.mrb[0].mxu0 %v238
        %v343 = vpop.f32.mrb[0].mxu0
        %v344 = vadd.f32 %v259, %v343
        %v345 = vpop.f32.mrb[0].mxu0
        %v346 = vpop.f32.mrb[0].mxu0
        %v347 = vpop.f32.mrb[0].mxu0
        %348 = vdwg.mxu0
        %v349 = vmax.f32 %v344, 0.0
        %v350 = vpack.c.bf16 %v349, %v349
        %vm351 = vcmask 125952
        %352 = vst.msk [vmem:[%s236] sm:$0xf] %vm351, %v350
        %p353 = scmp.lt.s32.totalorder %s21, 7
        %s354 = scalar_select %p353, %s21, 7
        %p355 = scmp.lt.s32.totalorder %s22, 0
        %s356 = scalar_select %p355, %s22, 0
        %s357 = sadd.s32 %s356, %s354
        %s358 = smul.addr %s357, 4
        %s359 = scalar_lea.vmem %s3, %s358
        // Predicated region
        $region37: #{state_decoder_forward.5} parent=31 // pred_check
          %p360 = pneg %p124
        $region38: #{state_decoder_forward.5} parent=31 // pred_check_branch
          %362 = sbr.rel (%p360) target = $region40
        $region39: #{state_decoder_forward.5} parent=31 // pred_region
          _
        $region40: #{state_decoder_forward.5} parent=31 // pred_fallthru
          _
      $region32: #{state_decoder_forward.5} parent=5 // pred_fallthru
        _
      %p363 = scmp.le.s32.totalorder 2, %s12
      // Predicated region
      $region41: #{state_decoder_forward.5} parent=5 // pred_check
        %p364 = pneg %p363
      $region42: #{state_decoder_forward.5} parent=5 // pred_check_branch
        %366 = sbr.rel (%p364) target = $region44
      $region43: #{state_decoder_forward.5} parent=5 // pred_region
        %s367 = ssub.s32 %s12, 2
        // Predicated region
        $region45: #{state_decoder_forward.5} parent=43 // pred_check
          %p368 = pneg %p130
        $region46: #{state_decoder_forward.5} parent=43 // pred_check_branch
          %370 = sbr.rel (%p368) target = $region48
        $region47: #{state_decoder_forward.5} parent=43 // pred_region
          %p371 = scmp.lt.s32.totalorder %s23, 7
          %s372 = scalar_select %p371, %s23, 7
          %p373 = scmp.lt.s32.totalorder %s24, 0
          %s374 = scalar_select %p373, %s24, 0
          %s375 = sadd.s32 %s374, %s372
          %s376 = smul.addr %s375, 4
          %s377 = scalar_lea.vmem %s3, %s376
        $region48: #{state_decoder_forward.5} parent=43 // pred_fallthru
          _
      $region44: #{state_decoder_forward.5} parent=5 // pred_fallthru
        _
    $region6: #{state_decoder_forward.5} parent=1 // loop_footer
      %s16 = sadd.s32 1, %s12
    $region7: #{state_decoder_forward.5} parent=1 // loop_footer_branch
      %11 = sbr.rel target = $region3
    $region8: #{state_decoder_forward.5} parent=1 // loop_exit
      _
    %378 = vsyncpa [#allocation3], 1
    %s379 = scalar_lea.sflag [#allocation3], 1
    %380 = vsyncpa %s379, 1

// kernel: state_decoder_forward.6
$region0: #{state_decoder_forward.6}
  #allocation0 [shape = 'u32[]', space=smem, size = 0x4, offset = 0x4, fixed_abs, tag = 'smem constant byte address 0x4 - core index']
  #allocation1 [shape = 'u32[144,128]{1,0:T(1,128)}', space=vmem, size = 0x12000, scoped, tag = 'internal scratch']
  %s0 = inlined_call_operand.vmem [shape: bf16[8,4,64], index: 0, kind: input, shape index: {}]
  %s1 = inlined_call_operand.vmem [shape: bf16[8,64,128], index: 1, kind: input, shape index: {}]
  %s2 = inlined_call_operand.vmem [shape: f32[4,1], index: 2, kind: input, shape index: {}]
  %s3 = inlined_call_operand.vmem [shape: bf16[8,4,128], index: 3, kind: output, shape index: {}]
  %s4 = sld [smem:[#allocation0]]
  $region45: #{state_decoder_forward.6} parent=0
    _
  %s6 = ssub.s32 1, %s4
  %s7 = scalar_select 0, %s6, %s4
  loop: start=0, step=1, limit=10
  $region2: #{state_decoder_forward.6} parent=0 // loop_pre_header
    _
  $region3: #{state_decoder_forward.6} parent=0 // loop_header
    %s9 = sphi 0, %s13
    %p10 = scmp.ge.s32.totalorder %s9, 10
    %s16 = sphi 0, %s28
    %s17 = sphi 0, %s24
    %s18 = sphi 0, %s16
    %s19 = sphi 0, %s17
    %s20 = sphi 0, %s18
    %s21 = sphi 0, %s19
    %s31 = sphi 0, %s33
    %s34 = sphi 0, %s31
    %s35 = sphi 0, %s34
    %s51 = sphi 0, %s35
    %s59 = sphi 0, %s61
    %s62 = sphi 0, %s59
    %s63 = sphi 0, %s62
    %s79 = sphi 0, %s63
    %s83 = sphi 0, %s83
    %s85 = sphi 0, %s83
    %s86 = sphi 0, %s85
    %s100 = sphi 0, %s86
    %s108 = sphi 0, %s110
    %s111 = sphi 0, %s108
    %s112 = sphi 0, %s111
    %s128 = sphi 0, %s112
  $region4: #{state_decoder_forward.6} parent=0 // loop_header_branch
    %12 = sbr.rel (%p10) target = $region8
  $region5: #{state_decoder_forward.6} parent=0 // loop_body
    %s14 = ssub.s32 %s9, 1
    %s15 = ssub.s32 %s9, 2
    %s22 = sadd.s32 1, %s17
    %p23 = scmp.ge.s32.totalorder %s22, 1
    %s24 = scalar_select %p23, 0, %s22
    %s25 = sadd.s32 1, %s16
    %s26 = scalar_select %p23, %s25, %s16
    %p27 = scmp.ge.s32.totalorder %s26, 8
    %s28 = scalar_select %p27, 0, %s26
    %s29 = ssub.s32 %s16, %s28
    %p30 = scmp.eq.s32.totalorder %s29, 0
    %s32 = sadd.s32 %s31, 1
    %s33 = scalar_select %p30, %s31, %s32
    %p36 = pneg %p30
    %p37 = scmp.eq.s32.totalorder %s9, 7
    %p38 = por %p36, %p37
    %p39 = scmp.ne.s32.totalorder %s31, %s34
    %p40 = scmp.eq.s32.totalorder %s9, 0
    %p41 = por %p39, %p40
    %p42 = scmp.ne.s32.totalorder %s31, %s34
    %p43 = scmp.eq.s32.totalorder %s14, 7
    %p44 = por %p42, %p43
    %p45 = scmp.ne.s32.totalorder %s34, %s35
    %p46 = scmp.eq.s32.totalorder %s14, 0
    %p47 = por %p45, %p46
    %p48 = scmp.ne.s32.totalorder %s34, %s35
    %p49 = scmp.eq.s32.totalorder %s15, 7
    %p50 = por %p48, %p49
    %p52 = scmp.ne.s32.totalorder %s35, %s51
    %p53 = scmp.eq.s32.totalorder %s15, 0
    %p54 = por %p52, %p53
    %s55 = ssub.s32 %s16, %s28
    %s56 = ssub.s32 %s17, %s24
    %s57 = sor.u32 %s55, %s56
    %p58 = scmp.eq.s32.totalorder %s57, 0
    %s60 = sadd.s32 %s59, 1
    %s61 = scalar_select %p58, %s59, %s60
    %p64 = pneg %p58
    %p65 = scmp.eq.s32.totalorder %s9, 7
    %p66 = por %p64, %p65
    %p67 = scmp.ne.s32.totalorder %s59, %s62
    %p68 = scmp.eq.s32.totalorder %s9, 0
    %p69 = por %p67, %p68
    %p70 = scmp.ne.s32.totalorder %s59, %s62
    %p71 = scmp.eq.s32.totalorder %s14, 7
    %p72 = por %p70, %p71
    %p73 = scmp.ne.s32.totalorder %s62, %s63
    %p74 = scmp.eq.s32.totalorder %s14, 0
    %p75 = por %p73, %p74
    %p76 = scmp.ne.s32.totalorder %s62, %s63
    %p77 = scmp.eq.s32.totalorder %s15, 7
    %p78 = por %p76, %p77
    %p80 = scmp.ne.s32.totalorder %s63, %s79
    %p81 = scmp.eq.s32.totalorder %s15, 0
    %p82 = por %p80, %p81
    %s84 = sadd.s32 %s83, 1
    %p87 = scmp.eq.s32.totalorder %s9, 7
    %p88 = scmp.ne.s32.totalorder %s83, %s85
    %p89 = scmp.eq.s32.totalorder %s9, 0
    %p90 = por %p88, %p89
    %p91 = scmp.ne.s32.totalorder %s83, %s85
    %p92 = scmp.eq.s32.totalorder %s14, 7
    %p93 = por %p91, %p92
    %p94 = scmp.ne.s32.totalorder %s85, %s86
    %p95 = scmp.eq.s32.totalorder %s14, 0
    %p96 = por %p94, %p95
    %p97 = scmp.ne.s32.totalorder %s85, %s86
    %p98 = scmp.eq.s32.totalorder %s15, 7
    %p99 = por %p97, %p98
    %p101 = scmp.ne.s32.totalorder %s86, %s100
    %p102 = scmp.eq.s32.totalorder %s15, 0
    %p103 = por %p101, %p102
    %s104 = ssub.s32 %s16, %s28
    %s105 = ssub.s32 %s17, %s24
    %s106 = sor.u32 %s104, %s105
    %p107 = scmp.eq.s32.totalorder %s106, 0
    %s109 = sadd.s32 %s108, 1
    %s110 = scalar_select %p107, %s108, %s109
    %p113 = pneg %p107
    %p114 = scmp.eq.s32.totalorder %s9, 7
    %p115 = por %p113, %p114
    %p116 = scmp.ne.s32.totalorder %s108, %s111
    %p117 = scmp.eq.s32.totalorder %s9, 0
    %p118 = por %p116, %p117
    %p119 = scmp.ne.s32.totalorder %s108, %s111
    %p120 = scmp.eq.s32.totalorder %s14, 7
    %p121 = por %p119, %p120
    %p122 = scmp.ne.s32.totalorder %s111, %s112
    %p123 = scmp.eq.s32.totalorder %s14, 0
    %p124 = por %p122, %p123
    %p125 = scmp.ne.s32.totalorder %s111, %s112
    %p126 = scmp.eq.s32.totalorder %s15, 7
    %p127 = por %p125, %p126
    %p129 = scmp.ne.s32.totalorder %s112, %s128
    %p130 = scmp.eq.s32.totalorder %s15, 0
    %p131 = por %p129, %p130
    %p132 = scmp.le.s32.totalorder 1, %s9
    %p133 = scmp.lt.s32.totalorder %s9, 9
    %p134 = pnand %p132, %p133
    %p135 = pneg %p134
    // Predicated region
    $region9: #{state_decoder_forward.6} parent=5 // pred_check
      _
    $region10: #{state_decoder_forward.6} parent=5 // pred_check_branch
      %137 = sbr.rel (%p134) target = $region12
    $region11: #{state_decoder_forward.6} parent=5 // pred_region
      %s138 = ssub.s32 %s9, 1
      // Predicated region
      $region13: #{state_decoder_forward.6} parent=11 // pred_check
        %p139 = pneg %p96
      $region14: #{state_decoder_forward.6} parent=11 // pred_check_branch
        %141 = sbr.rel (%p139) target = $region16
      $region15: #{state_decoder_forward.6} parent=11 // pred_region
        _
      $region16: #{state_decoder_forward.6} parent=11 // pred_fallthru
        _
    $region12: #{state_decoder_forward.6} parent=5 // pred_fallthru
      _
    %p142 = scmp.lt.s32.totalorder %s9, 8
    // Predicated region
    $region17: #{state_decoder_forward.6} parent=5 // pred_check
      %p143 = pneg %p142
    $region18: #{state_decoder_forward.6} parent=5 // pred_check_branch
      %145 = sbr.rel (%p143) target = $region20
    $region19: #{state_decoder_forward.6} parent=5 // pred_region
      // Predicated region
      $region21: #{state_decoder_forward.6} parent=19 // pred_check
        %p146 = pneg %p41
      $region22: #{state_decoder_forward.6} parent=19 // pred_check_branch
        %148 = sbr.rel (%p146) target = $region24
      $region23: #{state_decoder_forward.6} parent=19 // pred_region
        %p149 = scmp.lt.s32.totalorder %s16, 7
        %s150 = scalar_select %p149, %s16, 7
        %s151 = smul.addr %s150, 2
        %s152 = scalar_lea.vmem %s0, %s151
      $region24: #{state_decoder_forward.6} parent=19 // pred_fallthru
        _
      // Predicated region
      $region25: #{state_decoder_forward.6} parent=19 // pred_check
        %p153 = pneg %p69
      $region26: #{state_decoder_forward.6} parent=19 // pred_check_branch
        %155 = sbr.rel (%p153) target = $region28
      $region27: #{state_decoder_forward.6} parent=19 // pred_region
        %p156 = scmp.lt.s32.totalorder %s16, 7
        %s157 = scalar_select %p156, %s16, 7
        %p158 = scmp.lt.s32.totalorder %s17, 0
        %s159 = scalar_select %p158, %s17, 0
        %s160 = smul.addr %s157, 8
        %s161 = sadd.s32 %s159, %s160
        %s162 = smul.addr %s161, 4
        %s163 = scalar_lea.vmem %s1, %s162
      $region28: #{state_decoder_forward.6} parent=19 // pred_fallthru
        _
    $region20: #{state_decoder_forward.6} parent=5 // pred_fallthru
      _
    %p164 = scmp.le.s32.totalorder 1, %s9
    %p165 = scmp.lt.s32.totalorder %s9, 9
    %p166 = pnand %p164, %p165
    %p167 = pneg %p166
    // Predicated region
    $region29: #{state_decoder_forward.6} parent=5 // pred_check
      _
    $region30: #{state_decoder_forward.6} parent=5 // pred_check_branch
      %169 = sbr.rel (%p166) target = $region32
    $region31: #{state_decoder_forward.6} parent=5 // pred_region
      %s170 = ssub.s32 %s9, 1
      %p171 = scmp.lt.s32.totalorder %s18, 7
      %s172 = scalar_select %p171, %s18, 7
      %s173 = smul.addr %s172, 2
      %s174 = scalar_lea.vmem %s0, %s173
      %p175 = pneg %p47
      %p176 = pneg %p44
      %p177 = scmp.lt.s32.totalorder %s18, 7
      %s178 = scalar_select %p177, %s18, 7
      %p179 = scmp.lt.s32.totalorder %s19, 0
      %s180 = scalar_select %p179, %s19, 0
      %s181 = smul.addr %s178, 8
      %s182 = sadd.s32 %s180, %s181
      %s183 = smul.addr %s182, 4
      %s184 = scalar_lea.vmem %s1, %s183
      %p185 = pneg %p75
      %p186 = pneg %p72
      %p187 = pneg %p96
      %p188 = pneg %p93
      %p189 = pneg %p124
      %p190 = pneg %p121
      %p191 = scmp.lt.s32.totalorder %s18, 7
      %s192 = scalar_select %p191, %s18, 7
      %p193 = scmp.lt.s32.totalorder %s19, 0
      %s194 = scalar_select %p193, %s19, 0
      %s195 = sadd.s32 %s194, %s192
      %s196 = smul.addr %s195, 2
      %s197 = scalar_lea.vmem %s3, %s196
      %p198 = scmp.lt.s32.totalorder %s18, 7
      %s199 = scalar_select %p198, %s18, 7
      %s200 = smul.addr %s199, 2
      %s201 = scalar_lea.vmem %s0, %s200
      %p202 = scmp.lt.s32.totalorder %s18, 7
      %s203 = scalar_select %p202, %s18, 7
      %p204 = scmp.lt.s32.totalorder %s19, 0
      %s205 = scalar_select %p204, %s19, 0
      %s206 = smul.addr %s203, 8
      %s207 = sadd.s32 %s205, %s206
      %s208 = smul.addr %s207, 4
      %s209 = scalar_lea.vmem %s1, %s208
      %p210 = scmp.lt.s32.totalorder %s18, 7
      %s211 = scalar_select %p210, %s18, 7
      %p212 = scmp.lt.s32.totalorder %s19, 0
      %s213 = scalar_select %p212, %s19, 0
      %s214 = sadd.s32 %s213, %s211
      %s215 = smul.addr %s214, 2
      %s216 = scalar_lea.vmem %s3, %s215
      %v218 = vld [vmem:[%s201] sm:$0x3]
      %v219 = vld [vmem:[%s209] sm:$0xf]
      %v220 = vld [vmem:[%s209 + $0x4] sm:$0xf]
      %v221 = vld [vmem:[%s209 + $0x8] sm:$0xf]
      %v222 = vld [vmem:[%s209 + $0xc] sm:$0xf]
      %v223 = vld [vmem:[%s209 + $0x10] sm:$0xf]
      %v224 = vld [vmem:[%s209 + $0x14] sm:$0xf]
      %v225 = vld [vmem:[%s209 + $0x18] sm:$0xf]
      %v226 = vld [vmem:[%s209 + $0x1c] sm:$0xf]
      %v227 = vld [vmem:[%s2] sm:$0xf]
      %229 = vset.pattern.permute.xlu0 0
      %230 = vperm.xlu0 %229, %v227
      %v231 = vpop.permute.xlu0 %230
      %v241 = vunpack.c.l.b16 %v219
      %v242 = vunpack.c.l.b16 %v220
      %v243 = vunpack.c.l.b16 %v221
      %v244 = vunpack.c.l.b16 %v222
      %v245 = vunpack.c.l.b16 %v223
      %v246 = vunpack.c.l.b16 %v224
      %v247 = vunpack.c.l.b16 %v225
      %v248 = vunpack.c.l.b16 %v226
      %v249 = vpack.c.b16 %v242, %v241
      %v250 = vpack.c.b16 %v244, %v243
      %v251 = vpack.c.b16 %v246, %v245
      %v252 = vpack.c.b16 %v248, %v247
      %vm257 = vcmask 523264
      %v259 = vsel %vm257, %v218, 0
      %261 = vmatprep.subr.bf16.mxu0 0
      %262 = vmatpush1.bf16.msra.mxu0 %v249
      %263 = vmatprep.subr.bf16.mxu0 0
      %264 = vmatpush1.bf16.msra.mxu0 %v250
      %265 = vmatprep.subr.bf16.mxu0 0
      %266 = vmatpush1.bf16.msra.mxu0 %v251
      %267 = vmatprep.subr.bf16.mxu0 0
      %268 = vmatpush1.bf16.msra.mxu0 %v252
      %269 = vmatprep.subr.bf16.mxu0 0
      %270 = vmatpush1.bf16.msra.mxu0 0
      %271 = vmatprep.subr.bf16.mxu0 0
      %272 = vmatpush1.bf16.msra.mxu0 0
      %273 = vmatprep.subr.bf16.mxu0 0
      %274 = vmatpush1.bf16.msra.mxu0 0
      %275 = vmatprep.subr.bf16.mxu0 0
      %276 = vmatpush1.bf16.msra.mxu0 0
      %277 = vmatprep.subr.bf16.mxu0 0
      %278 = vmatpush1.bf16.msra.mxu0 0
      %279 = vmatprep.subr.bf16.mxu0 0
      %280 = vmatpush1.bf16.msra.mxu0 0
      %281 = vmatprep.subr.bf16.mxu0 0
      %282 = vmatpush1.bf16.msra.mxu0 0
      %283 = vmatprep.subr.bf16.mxu0 0
      %284 = vmatpush1.bf16.msra.mxu0 0
      %285 = vmatprep.subr.bf16.mxu0 0
      %286 = vmatpush1.bf16.msra.mxu0 0
      %287 = vmatprep.subr.bf16.mxu0 0
      %288 = vmatpush1.bf16.msra.mxu0 0
      %289 = vmatprep.subr.bf16.mxu0 0
      %290 = vmatpush1.bf16.msra.mxu0 0
      %291 = vmatprep.subr.bf16.mxu0 0
      %292 = vmatpush1.bf16.msra.mxu0 0
      %293 = vmatprep.mubr.bf16.mxu0 0
      %294 = vmatmul.mubr.bf16.gmra.mrb[0].mxu0 %v259
      %v295 = vpop.f32.mrb[0].mxu0
      %v296 = vadd.f32 %v231, %v295
      %v297 = vpop.f32.mrb[0].mxu0
      %v298 = vpop.f32.mrb[0].mxu0
      %v299 = vpop.f32.mrb[0].mxu0
      %300 = vdwg.mxu0
      %v301 = vmax.f32 %v296, 0.0
      %v302 = vpack.c.bf16 %v301, %v301
      %303 = vst [vmem:[%s216] sm:$0x3] %v302
      %p304 = scmp.lt.s32.totalorder %s18, 7
      %s305 = scalar_select %p304, %s18, 7
      %p306 = scmp.lt.s32.totalorder %s19, 0
      %s307 = scalar_select %p306, %s19, 0
      %s308 = sadd.s32 %s307, %s305
      %s309 = smul.addr %s308, 2
      %s310 = scalar_lea.vmem %s3, %s309
      // Predicated region
      $region33: #{state_decoder_forward.6} parent=31 // pred_check
        %p311 = pneg %p121
      $region34: #{state_decoder_forward.6} parent=31 // pred_check_branch
        %313 = sbr.rel (%p311) target = $region36
      $region35: #{state_decoder_forward.6} parent=31 // pred_region
        _
      $region36: #{state_decoder_forward.6} parent=31 // pred_fallthru
        _
    $region32: #{state_decoder_forward.6} parent=5 // pred_fallthru
      _
    %p314 = scmp.le.s32.totalorder 2, %s9
    // Predicated region
    $region37: #{state_decoder_forward.6} parent=5 // pred_check
      %p315 = pneg %p314
    $region38: #{state_decoder_forward.6} parent=5 // pred_check_branch
      %317 = sbr.rel (%p315) target = $region40
    $region39: #{state_decoder_forward.6} parent=5 // pred_region
      %s318 = ssub.s32 %s9, 2
      // Predicated region
      $region41: #{state_decoder_forward.6} parent=39 // pred_check
        %p319 = pneg %p127
      $region42: #{state_decoder_forward.6} parent=39 // pred_check_branch
        %321 = sbr.rel (%p319) target = $region44
      $region43: #{state_decoder_forward.6} parent=39 // pred_region
        %p322 = scmp.lt.s32.totalorder %s20, 7
        %s323 = scalar_select %p322, %s20, 7
        %p324 = scmp.lt.s32.totalorder %s21, 0
        %s325 = scalar_select %p324, %s21, 0
        %s326 = sadd.s32 %s325, %s323
        %s327 = smul.addr %s326, 2
        %s328 = scalar_lea.vmem %s3, %s327
      $region44: #{state_decoder_forward.6} parent=39 // pred_fallthru
        _
    $region40: #{state_decoder_forward.6} parent=5 // pred_fallthru
      _
  $region6: #{state_decoder_forward.6} parent=0 // loop_footer
    %s13 = sadd.s32 1, %s9
  $region7: #{state_decoder_forward.6} parent=0 // loop_footer_branch
    %8 = sbr.rel target = $region3
  $region8: #{state_decoder_forward.6} parent=0 // loop_exit
    _

// kernel: state_decoder_forward.7
$region0: #{state_decoder_forward.7}
  #allocation0 [shape = 'u32[]', space=smem, size = 0x4, offset = 0x4, fixed_abs, tag = 'smem constant byte address 0x4 - core index']
  #allocation1 [shape = 'u32[144,128]{1,0:T(1,128)}', space=vmem, size = 0x12000, scoped, tag = 'internal scratch']
  %s0 = inlined_call_operand.vmem [shape: bf16[1,3,108], index: 0, kind: input, shape index: {}]
  %s1 = inlined_call_operand.vmem [shape: bf16[1,108,1024], index: 1, kind: input, shape index: {}]
  %s2 = inlined_call_operand.vmem [shape: f32[3,1], index: 2, kind: input, shape index: {}]
  %s3 = inlined_call_operand.vmem [shape: f32[1,3,1024], index: 3, kind: output, shape index: {}]
  %s4 = sld [smem:[#allocation0]]
  $region68: #{state_decoder_forward.7} parent=0
    _
  %s6 = ssub.s32 1, %s4
  %s7 = scalar_select 0, %s6, %s4
  $region1: #{state_decoder_forward.7} parent=0
    #allocation2 [shape = 'u8[229376]{0}', space=vmem, size = 0x38000, scoped, tag = 'input window, operand 1']
    loop: start=0, step=1, limit=4
    $region2: #{state_decoder_forward.7} parent=1 // loop_pre_header
      _
    $region3: #{state_decoder_forward.7} parent=1 // loop_header
      %s9 = sphi 0, %s13
      %p10 = scmp.ge.s32.totalorder %s9, 4
      %s16 = sphi 0, %s28
      %s17 = sphi 0, %s24
      %s18 = sphi 0, %s16
      %s19 = sphi 0, %s17
      %s20 = sphi 0, %s18
      %s21 = sphi 0, %s19
      %s31 = sphi 0, %s33
      %s34 = sphi 0, %s31
      %s35 = sphi 0, %s34
      %s51 = sphi 0, %s35
      %s59 = sphi 0, %s61
      %s62 = sphi 0, %s59
      %s63 = sphi 0, %s62
      %s79 = sphi 0, %s63
      %s83 = sphi 0, %s83
      %s85 = sphi 0, %s83
      %s86 = sphi 0, %s85
      %s100 = sphi 0, %s86
      %s108 = sphi 0, %s110
      %s111 = sphi 0, %s108
      %s112 = sphi 0, %s111
      %s128 = sphi 0, %s112
    $region4: #{state_decoder_forward.7} parent=1 // loop_header_branch
      %12 = sbr.rel (%p10) target = $region8
    $region5: #{state_decoder_forward.7} parent=1 // loop_body
      %s14 = ssub.s32 %s9, 1
      %s15 = ssub.s32 %s9, 2
      %s22 = sadd.s32 1, %s17
      %p23 = scmp.ge.s32.totalorder %s22, 2
      %s24 = scalar_select %p23, 0, %s22
      %s25 = sadd.s32 1, %s16
      %s26 = scalar_select %p23, %s25, %s16
      %p27 = scmp.ge.s32.totalorder %s26, 1
      %s28 = scalar_select %p27, 0, %s26
      %s29 = ssub.s32 %s16, %s28
      %p30 = scmp.eq.s32.totalorder %s29, 0
      %s32 = sadd.s32 %s31, 1
      %s33 = scalar_select %p30, %s31, %s32
      %p36 = pneg %p30
      %p37 = scmp.eq.s32.totalorder %s9, 1
      %p38 = por %p36, %p37
      %p39 = scmp.ne.s32.totalorder %s31, %s34
      %p40 = scmp.eq.s32.totalorder %s9, 0
      %p41 = por %p39, %p40
      %p42 = scmp.ne.s32.totalorder %s31, %s34
      %p43 = scmp.eq.s32.totalorder %s14, 1
      %p44 = por %p42, %p43
      %p45 = scmp.ne.s32.totalorder %s34, %s35
      %p46 = scmp.eq.s32.totalorder %s14, 0
      %p47 = por %p45, %p46
      %p48 = scmp.ne.s32.totalorder %s34, %s35
      %p49 = scmp.eq.s32.totalorder %s15, 1
      %p50 = por %p48, %p49
      %p52 = scmp.ne.s32.totalorder %s35, %s51
      %p53 = scmp.eq.s32.totalorder %s15, 0
      %p54 = por %p52, %p53
      %s55 = ssub.s32 %s16, %s28
      %s56 = ssub.s32 %s17, %s24
      %s57 = sor.u32 %s55, %s56
      %p58 = scmp.eq.s32.totalorder %s57, 0
      %s60 = sadd.s32 %s59, 1
      %s61 = scalar_select %p58, %s59, %s60
      %p64 = pneg %p58
      %p65 = scmp.eq.s32.totalorder %s9, 1
      %p66 = por %p64, %p65
      %p67 = scmp.ne.s32.totalorder %s59, %s62
      %p68 = scmp.eq.s32.totalorder %s9, 0
      %p69 = por %p67, %p68
      %p70 = scmp.ne.s32.totalorder %s59, %s62
      %p71 = scmp.eq.s32.totalorder %s14, 1
      %p72 = por %p70, %p71
      %p73 = scmp.ne.s32.totalorder %s62, %s63
      %p74 = scmp.eq.s32.totalorder %s14, 0
      %p75 = por %p73, %p74
      %p76 = scmp.ne.s32.totalorder %s62, %s63
      %p77 = scmp.eq.s32.totalorder %s15, 1
      %p78 = por %p76, %p77
      %p80 = scmp.ne.s32.totalorder %s63, %s79
      %p81 = scmp.eq.s32.totalorder %s15, 0
      %p82 = por %p80, %p81
      %s84 = sadd.s32 %s83, 1
      %p87 = scmp.eq.s32.totalorder %s9, 1
      %p88 = scmp.ne.s32.totalorder %s83, %s85
      %p89 = scmp.eq.s32.totalorder %s9, 0
      %p90 = por %p88, %p89
      %p91 = scmp.ne.s32.totalorder %s83, %s85
      %p92 = scmp.eq.s32.totalorder %s14, 1
      %p93 = por %p91, %p92
      %p94 = scmp.ne.s32.totalorder %s85, %s86
      %p95 = scmp.eq.s32.totalorder %s14, 0
      %p96 = por %p94, %p95
      %p97 = scmp.ne.s32.totalorder %s85, %s86
      %p98 = scmp.eq.s32.totalorder %s15, 1
      %p99 = por %p97, %p98
      %p101 = scmp.ne.s32.totalorder %s86, %s100
      %p102 = scmp.eq.s32.totalorder %s15, 0
      %p103 = por %p101, %p102
      %s104 = ssub.s32 %s16, %s28
      %s105 = ssub.s32 %s17, %s24
      %s106 = sor.u32 %s104, %s105
      %p107 = scmp.eq.s32.totalorder %s106, 0
      %s109 = sadd.s32 %s108, 1
      %s110 = scalar_select %p107, %s108, %s109
      %p113 = pneg %p107
      %p114 = scmp.eq.s32.totalorder %s9, 1
      %p115 = por %p113, %p114
      %p116 = scmp.ne.s32.totalorder %s108, %s111
      %p117 = scmp.eq.s32.totalorder %s9, 0
      %p118 = por %p116, %p117
      %p119 = scmp.ne.s32.totalorder %s108, %s111
      %p120 = scmp.eq.s32.totalorder %s14, 1
      %p121 = por %p119, %p120
      %p122 = scmp.ne.s32.totalorder %s111, %s112
      %p123 = scmp.eq.s32.totalorder %s14, 0
      %p124 = por %p122, %p123
      %p125 = scmp.ne.s32.totalorder %s111, %s112
      %p126 = scmp.eq.s32.totalorder %s15, 1
      %p127 = por %p125, %p126
      %p129 = scmp.ne.s32.totalorder %s112, %s128
      %p130 = scmp.eq.s32.totalorder %s15, 0
      %p131 = por %p129, %p130
      %p132 = scmp.le.s32.totalorder 1, %s9
      %p133 = scmp.lt.s32.totalorder %s9, 3
      %p134 = pnand %p132, %p133
      %p135 = pneg %p134
      // Predicated region
      $region9: #{state_decoder_forward.7} parent=5 // pred_check
        _
      $region10: #{state_decoder_forward.7} parent=5 // pred_check_branch
        %137 = sbr.rel (%p134) target = $region12
      $region11: #{state_decoder_forward.7} parent=5 // pred_region
        %s138 = ssub.s32 %s9, 1
        // Predicated region
        $region13: #{state_decoder_forward.7} parent=11 // pred_check
          %p139 = pneg %p47
        $region14: #{state_decoder_forward.7} parent=11 // pred_check_branch
          %141 = sbr.rel (%p139) target = $region16
        $region15: #{state_decoder_forward.7} parent=11 // pred_region
          %p142 = scmp.lt.s32.totalorder %s18, 0
          %s143 = scalar_select %p142, %s18, 0
          %s144 = smul.addr %s143, 2
          %s145 = scalar_lea.vmem %s0, %s144
        $region16: #{state_decoder_forward.7} parent=11 // pred_fallthru
          _
        // Predicated region
        $region17: #{state_decoder_forward.7} parent=11 // pred_check
          %p146 = pneg %p96
        $region18: #{state_decoder_forward.7} parent=11 // pred_check_branch
          %148 = sbr.rel (%p146) target = $region20
        $region19: #{state_decoder_forward.7} parent=11 // pred_region
          _
        $region20: #{state_decoder_forward.7} parent=11 // pred_fallthru
          _
      $region12: #{state_decoder_forward.7} parent=5 // pred_fallthru
        _
      %p149 = scmp.lt.s32.totalorder %s9, 2
      // Predicated region
      $region21: #{state_decoder_forward.7} parent=5 // pred_check
        %p150 = pneg %p149
      $region22: #{state_decoder_forward.7} parent=5 // pred_check_branch
        %152 = sbr.rel (%p150) target = $region24
      $region23: #{state_decoder_forward.7} parent=5 // pred_region
        // Predicated region
        $region25: #{state_decoder_forward.7} parent=23 // pred_check
          %p153 = pneg %p69
        $region26: #{state_decoder_forward.7} parent=23 // pred_check_branch
          %155 = sbr.rel (%p153) target = $region28
        $region27: #{state_decoder_forward.7} parent=23 // pred_region
          %s156 = sand.u32 %s59, 1
          %s157 = sand.u32 %s59, 1
          %s158 = smul.addr %s157, 224
          %s159 = scalar_lea.vmem [#allocation2], %s158
          %s160 = smul.u32 4, %s17
          %s161 = smul.addr %s16, 112
          %s162 = sadd.s32 %s160, %s161
          %s163 = smul.addr %s162, 4
          %s164 = scalar_lea.vmem %s1, %s163
          // Predicated region
          $region29: #{state_decoder_forward.7} parent=27 // pred_check
            _
          $region30: #{state_decoder_forward.7} parent=27 // pred_check_branch
            %166 = sbr.rel (0) target = $region32
          $region31: #{state_decoder_forward.7} parent=27 // pred_region
            // Predicated region
            $region33: #{state_decoder_forward.7} parent=31 // pred_check
              _
            $region34: #{state_decoder_forward.7} parent=31 // pred_check_branch
              %168 = sbr.rel (0) target = $region36
            $region35: #{state_decoder_forward.7} parent=31 // pred_region
              loop: start=0, step=1, limit=1
              $region37: #{state_decoder_forward.7} parent=35 // loop_pre_header
                _
              $region38: #{state_decoder_forward.7} parent=35 // loop_header
                %s170 = sphi 0, %s174
                %p171 = scmp.ge.s32.totalorder %s170, 1
                %s175 = sphi %s164, %s164
                %s176 = sphi %s159, %s159
              $region39: #{state_decoder_forward.7} parent=35 // loop_header_branch
                %173 = sbr.rel (%p171) target = $region43
              $region40: #{state_decoder_forward.7} parent=35 // loop_body
                %v177 = vld [vmem:[%s175] sm:$0xff]
                %178 = vst [vmem:[%s176] sm:$0xff] %v177
                %v179 = vld [vmem:[%s175 + $0x8] sm:$0xff]
                %180 = vst [vmem:[%s176 + $0x8] sm:$0xff] %v179
                %v181 = vld [vmem:[%s175 + $0x20] sm:$0xff]
                %182 = vst [vmem:[%s176 + $0x10] sm:$0xff] %v181
                %v183 = vld [vmem:[%s175 + $0x28] sm:$0xff]
                %184 = vst [vmem:[%s176 + $0x18] sm:$0xff] %v183
                %v185 = vld [vmem:[%s175 + $0x40] sm:$0xff]
                %186 = vst [vmem:[%s176 + $0x20] sm:$0xff] %v185
                %v187 = vld [vmem:[%s175 + $0x48] sm:$0xff]
                %188 = vst [vmem:[%s176 + $0x28] sm:$0xff] %v187
                %v189 = vld [vmem:[%s175 + $0x60] sm:$0xff]
                %190 = vst [vmem:[%s176 + $0x30] sm:$0xff] %v189
                %v191 = vld [vmem:[%s175 + $0x68] sm:$0xff]
                %192 = vst [vmem:[%s176 + $0x38] sm:$0xff] %v191
                %v193 = vld [vmem:[%s175 + $0x80] sm:$0xff]
                %194 = vst [vmem:[%s176 + $0x40] sm:$0xff] %v193
                %v195 = vld [vmem:[%s175 + $0x88] sm:$0xff]
                %196 = vst [vmem:[%s176 + $0x48] sm:$0xff] %v195
                %v197 = vld [vmem:[%s175 + $0xa0] sm:$0xff]
                %198 = vst [vmem:[%s176 + $0x50] sm:$0xff] %v197
                %v199 = vld [vmem:[%s175 + $0xa8] sm:$0xff]
                %200 = vst [vmem:[%s176 + $0x58] sm:$0xff] %v199
                %v201 = vld [vmem:[%s175 + $0xc0] sm:$0xff]
                %202 = vst [vmem:[%s176 + $0x60] sm:$0xff] %v201
                %v203 = vld [vmem:[%s175 + $0xc8] sm:$0xff]
                %204 = vst [vmem:[%s176 + $0x68] sm:$0xff] %v203
                %v205 = vld [vmem:[%s175 + $0xe0] sm:$0xff]
                %206 = vst [vmem:[%s176 + $0x70] sm:$0xff] %v205
                %v207 = vld [vmem:[%s175 + $0xe8] sm:$0xff]
                %208 = vst [vmem:[%s176 + $0x78] sm:$0xff] %v207
                %v209 = vld [vmem:[%s175 + $0x100] sm:$0xff]
                %210 = vst [vmem:[%s176 + $0x80] sm:$0xff] %v209
                %v211 = vld [vmem:[%s175 + $0x108] sm:$0xff]
                %212 = vst [vmem:[%s176 + $0x88] sm:$0xff] %v211
                %v213 = vld [vmem:[%s175 + $0x120] sm:$0xff]
                %214 = vst [vmem:[%s176 + $0x90] sm:$0xff] %v213
                %v215 = vld [vmem:[%s175 + $0x128] sm:$0xff]
                %216 = vst [vmem:[%s176 + $0x98] sm:$0xff] %v215
                %v217 = vld [vmem:[%s175 + $0x140] sm:$0xff]
                %218 = vst [vmem:[%s176 + $0xa0] sm:$0xff] %v217
                %v219 = vld [vmem:[%s175 + $0x148] sm:$0xff]
                %220 = vst [vmem:[%s176 + $0xa8] sm:$0xff] %v219
                %v221 = vld [vmem:[%s175 + $0x160] sm:$0xff]
                %222 = vst [vmem:[%s176 + $0xb0] sm:$0xff] %v221
                %v223 = vld [vmem:[%s175 + $0x168] sm:$0xff]
                %224 = vst [vmem:[%s176 + $0xb8] sm:$0xff] %v223
                %v225 = vld [vmem:[%s175 + $0x180] sm:$0xff]
                %226 = vst [vmem:[%s176 + $0xc0] sm:$0xff] %v225
                %v227 = vld [vmem:[%s175 + $0x188] sm:$0xff]
                %228 = vst [vmem:[%s176 + $0xc8] sm:$0xff] %v227
                %v229 = vld [vmem:[%s175 + $0x1a0] sm:$0xff]
                %230 = vst [vmem:[%s176 + $0xd0] sm:$0xff] %v229
                %v231 = vld [vmem:[%s175 + $0x1a8] sm:$0xff]
                %232 = vst [vmem:[%s176 + $0xd8] sm:$0xff] %v231
              $region41: #{state_decoder_forward.7} parent=35 // loop_footer
                %s174 = sadd.s32 1, %s170
              $region42: #{state_decoder_forward.7} parent=35 // loop_footer_branch
                %169 = sbr.rel target = $region38
              $region43: #{state_decoder_forward.7} parent=35 // loop_exit
                _
            $region36: #{state_decoder_forward.7} parent=31 // pred_fallthru
              _
            // Predicated region
            $region44: #{state_decoder_forward.7} parent=31 // pred_check
              _
            $region45: #{state_decoder_forward.7} parent=31 // pred_check_branch
              %234 = sbr.rel target = $region47
            $region46: #{state_decoder_forward.7} parent=31 // pred_region
              _
            $region47: #{state_decoder_forward.7} parent=31 // pred_fallthru
              _
          $region32: #{state_decoder_forward.7} parent=27 // pred_fallthru
            _
          %235 = vnop
        $region28: #{state_decoder_forward.7} parent=23 // pred_fallthru
          _
      $region24: #{state_decoder_forward.7} parent=5 // pred_fallthru
        _
      %p236 = scmp.le.s32.totalorder 1, %s9
      %p237 = scmp.lt.s32.totalorder %s9, 3
      %p238 = pnand %p236, %p237
      %p239 = pneg %p238
      // Predicated region
      $region48: #{state_decoder_forward.7} parent=5 // pred_check
        _
      $region49: #{state_decoder_forward.7} parent=5 // pred_check_branch
        %241 = sbr.rel (%p238) target = $region51
      $region50: #{state_decoder_forward.7} parent=5 // pred_region
        %s242 = ssub.s32 %s9, 1
        %s243 = sand.u32 %s62, 1
        %s244 = sand.u32 %s62, 1
        %s245 = smul.addr %s244, 224
        %s246 = scalar_lea.vmem [#allocation2], %s245
        // Predicated region
        $region52: #{state_decoder_forward.7} parent=50 // pred_check
          %p247 = pneg %p75
        $region53: #{state_decoder_forward.7} parent=50 // pred_check_branch
          %249 = sbr.rel (%p247) target = $region55
        $region54: #{state_decoder_forward.7} parent=50 // pred_region
          _
        $region55: #{state_decoder_forward.7} parent=50 // pred_fallthru
          _
        %p250 = scmp.lt.s32.totalorder %s18, 0
        %s251 = scalar_select %p250, %s18, 0
        %s252 = smul.addr %s251, 2
        %s253 = scalar_lea.vmem %s0, %s252
        %p254 = pneg %p47
        %p255 = pneg %p44
        %s256 = sand.u32 %s62, 1
        %s257 = sand.u32 %s62, 1
        %s258 = smul.addr %s257, 224
        %s259 = scalar_lea.vmem [#allocation2], %s258
        %p260 = pneg %p75
        %p261 = pneg %p72
        %p262 = pneg %p96
        %p263 = pneg %p93
        %p264 = pneg %p124
        %p265 = pneg %p121
        %s266 = smul.u32 4, %s19
        %p267 = scmp.lt.s32.totalorder %s18, 0
        %s268 = scalar_select %p267, %s18, 0
        %p269 = scmp.lt.s32.totalorder %s266, 7
        %s270 = scalar_select %p269, %s266, 7
        %s271 = smul.addr %s268, 8
        %s272 = sadd.s32 %s270, %s271
        %s273 = smul.addr %s272, 4
        %s274 = scalar_lea.vmem %s3, %s273
        %p275 = scmp.lt.s32.totalorder %s18, 0
        %s276 = scalar_select %p275, %s18, 0
        %s277 = smul.addr %s276, 2
        %s278 = scalar_lea.vmem %s0, %s277
        %s279 = smul.u32 4, %s19
        %s280 = smul.u32 4, %s19
        %p281 = scmp.lt.s32.totalorder %s18, 0
        %s282 = scalar_select %p281, %s18, 0
        %p283 = scmp.lt.s32.totalorder %s280, 7
        %s284 = scalar_select %p283, %s280, 7
        %s285 = smul.addr %s282, 8
        %s286 = sadd.s32 %s284, %s285
        %s287 = smul.addr %s286, 4
        %s288 = scalar_lea.vmem %s3, %s287
        %s289 = smul.u32 4, %s19
        %v291 = vld [vmem:[%s278] sm:$0x3]
        %v292 = vld [vmem:[%s246] sm:$0xff]
        %v293 = vld [vmem:[%s246 + $0x8] sm:$0xff]
        %v294 = vld [vmem:[%s246 + $0x10] sm:$0xff]
        %v295 = vld [vmem:[%s246 + $0x18] sm:$0xff]
        %v296 = vld [vmem:[%s246 + $0x20] sm:$0xff]
        %v297 = vld [vmem:[%s246 + $0x28] sm:$0xff]
        %v298 = vld [vmem:[%s246 + $0x30] sm:$0xff]
        %v299 = vld [vmem:[%s246 + $0x38] sm:$0xff]
        %v300 = vld [vmem:[%s246 + $0x40] sm:$0xff]
        %v301 = vld [vmem:[%s246 + $0x48] sm:$0xff]
        %v302 = vld [vmem:[%s246 + $0x50] sm:$0xff]
        %v303 = vld [vmem:[%s246 + $0x58] sm:$0xff]
        %v304 = vld [vmem:[%s246 + $0x60] sm:$0xff]
        %v305 = vld [vmem:[%s246 + $0x68] sm:$0xff]
        %v306 = vld [vmem:[%s246 + $0x70] sm:$0xff]
        %v307 = vld [vmem:[%s246 + $0x78] sm:$0xff]
        %v308 = vld [vmem:[%s246 + $0x80] sm:$0xff]
        %v309 = vld [vmem:[%s246 + $0x88] sm:$0xff]
        %v310 = vld [vmem:[%s246 + $0x90] sm:$0xff]
        %v311 = vld [vmem:[%s246 + $0x98] sm:$0xff]
        %v312 = vld [vmem:[%s246 + $0xa0] sm:$0xff]
        %v313 = vld [vmem:[%s246 + $0xa8] sm:$0xff]
        %v314 = vld [vmem:[%s246 + $0xb0] sm:$0xff]
        %v315 = vld [vmem:[%s246 + $0xb8] sm:$0xff]
        %v316 = vld [vmem:[%s246 + $0xc0] sm:$0xff]
        %v317 = vld [vmem:[%s246 + $0xc8] sm:$0xff]
        %v318 = vld [vmem:[%s246 + $0xd0] sm:$0x33]
        %v319 = vld [vmem:[%s246 + $0xd8] sm:$0x33]
        %v320 = vld [vmem:[%s2] sm:$0x7]
        %322 = vset.pattern.permute.xlu0 0
        %323 = vperm.xlu0 %322, %v320
        %v324 = vpop.permute.xlu0 %323
        %v354 = vunpack.c.l.b16 %v292
        %v355 = vunpack.c.h.b16 %v292
        %v356 = vunpack.c.l.b16 %v293
        %v357 = vunpack.c.h.b16 %v293
        %v358 = vunpack.c.l.b16 %v294
        %v359 = vunpack.c.h.b16 %v294
        %v360 = vunpack.c.l.b16 %v295
        %v361 = vunpack.c.h.b16 %v295
        %v362 = vunpack.c.l.b16 %v296
        %v363 = vunpack.c.h.b16 %v296
        %v364 = vunpack.c.l.b16 %v297
        %v365 = vunpack.c.h.b16 %v297
        %v366 = vunpack.c.l.b16 %v298
        %v367 = vunpack.c.h.b16 %v298
        %v368 = vunpack.c.l.b16 %v299
        %v369 = vunpack.c.h.b16 %v299
        %v370 = vunpack.c.l.b16 %v300
        %v371 = vunpack.c.h.b16 %v300
        %v372 = vunpack.c.l.b16 %v301
        %v373 = vunpack.c.h.b16 %v301
        %v374 = vunpack.c.l.b16 %v302
        %v375 = vunpack.c.h.b16 %v302
        %v376 = vunpack.c.l.b16 %v303
        %v377 = vunpack.c.h.b16 %v303
        %v378 = vunpack.c.l.b16 %v304
        %v379 = vunpack.c.h.b16 %v304
        %v380 = vunpack.c.l.b16 %v305
        %v381 = vunpack.c.h.b16 %v305
        %v382 = vunpack.c.l.b16 %v306
        %v383 = vunpack.c.h.b16 %v306
        %v384 = vunpack.c.l.b16 %v307
        %v385 = vunpack.c.h.b16 %v307
        %v386 = vunpack.c.l.b16 %v308
        %v387 = vunpack.c.h.b16 %v308
        %v388 = vunpack.c.l.b16 %v309
        %v389 = vunpack.c.h.b16 %v309
        %v390 = vunpack.c.l.b16 %v310
        %v391 = vunpack.c.h.b16 %v310
        %v392 = vunpack.c.l.b16 %v311
        %v393 = vunpack.c.h.b16 %v311
        %v394 = vunpack.c.l.b16 %v312
        %v395 = vunpack.c.h.b16 %v312
        %v396 = vunpack.c.l.b16 %v313
        %v397 = vunpack.c.h.b16 %v313
        %v398 = vunpack.c.l.b16 %v314
        %v399 = vunpack.c.h.b16 %v314
        %v400 = vunpack.c.l.b16 %v315
        %v401 = vunpack.c.h.b16 %v315
        %v402 = vunpack.c.l.b16 %v316
        %v403 = vunpack.c.h.b16 %v316
        %v404 = vunpack.c.l.b16 %v317
        %v405 = vunpack.c.h.b16 %v317
        %v406 = vunpack.c.l.b16 %v318
        %v407 = vunpack.c.h.b16 %v318
        %v408 = vunpack.c.l.b16 %v319
        %v409 = vunpack.c.h.b16 %v319
        %v410 = vpack.c.b16 %v358, %v354
        %v411 = vpack.c.b16 %v359, %v355
        %v412 = vpack.c.b16 %v360, %v356
        %v413 = vpack.c.b16 %v361, %v357
        %v414 = vpack.c.b16 %v366, %v362
        %v415 = vpack.c.b16 %v367, %v363
        %v416 = vpack.c.b16 %v368, %v364
        %v417 = vpack.c.b16 %v369, %v365
        %v418 = vpack.c.b16 %v374, %v370
        %v419 = vpack.c.b16 %v375, %v371
        %v420 = vpack.c.b16 %v376, %v372
        %v421 = vpack.c.b16 %v377, %v373
        %v422 = vpack.c.b16 %v382, %v378
        %v423 = vpack.c.b16 %v383, %v379
        %v424 = vpack.c.b16 %v384, %v380
        %v425 = vpack.c.b16 %v385, %v381
        %v426 = vpack.c.b16 %v390, %v386
        %v427 = vpack.c.b16 %v391, %v387
        %v428 = vpack.c.b16 %v392, %v388
        %v429 = vpack.c.b16 %v393, %v389
        %v430 = vpack.c.b16 %v398, %v394
        %v431 = vpack.c.b16 %v399, %v395
        %v432 = vpack.c.b16 %v400, %v396
        %v433 = vpack.c.b16 %v401, %v397
        %v434 = vpack.c.b16 %v406, %v402
        %v435 = vpack.c.b16 %v407, %v403
        %v436 = vpack.c.b16 %v408, %v404
        %v437 = vpack.c.b16 %v409, %v405
        %vm462 = vcmask 883712
        %v464 = vsel %vm462, %v291, 0
        %vm466 = vcmask 1045504
        %v468 = vsel %vm466, %v434, 0
        %v471 = vsel %vm466, %v435, 0
        %v474 = vsel %vm466, %v436, 0
        %v477 = vsel %vm466, %v437, 0
        %479 = vmatprep.subr.bf16.mxu0 %v411
        %480 = vmatpush1.bf16.msra.mxu0 %v410
        %481 = vmatprep.subr.bf16.mxu0 %v415
        %482 = vmatpush1.bf16.msra.mxu0 %v414
        %483 = vmatprep.subr.bf16.mxu0 %v419
        %484 = vmatpush1.bf16.msra.mxu0 %v418
        %485 = vmatprep.subr.bf16.mxu0 %v423
        %486 = vmatpush1.bf16.msra.mxu0 %v422
        %487 = vmatprep.subr.bf16.mxu0 %v427
        %488 = vmatpush1.bf16.msra.mxu0 %v426
        %489 = vmatprep.subr.bf16.mxu0 %v431
        %490 = vmatpush1.bf16.msra.mxu0 %v430
        %491 = vmatprep.subr.bf16.mxu0 %v471
        %492 = vmatpush1.bf16.msra.mxu0 %v468
        %493 = vmatprep.subr.bf16.mxu0 0
        %494 = vmatpush1.bf16.msra.mxu0 0
        %495 = vmatprep.subr.bf16.mxu0 0
        %496 = vmatpush1.bf16.msra.mxu0 0
        %497 = vmatprep.subr.bf16.mxu0 0
        %498 = vmatpush1.bf16.msra.mxu0 0
        %499 = vmatprep.subr.bf16.mxu0 0
        %500 = vmatpush1.bf16.msra.mxu0 0
        %501 = vmatprep.subr.bf16.mxu0 0
        %502 = vmatpush1.bf16.msra.mxu0 0
        %503 = vmatprep.subr.bf16.mxu0 0
        %504 = vmatpush1.bf16.msra.mxu0 0
        %505 = vmatprep.subr.bf16.mxu0 0
        %506 = vmatpush1.bf16.msra.mxu0 0
        %507 = vmatprep.subr.bf16.mxu0 0
        %508 = vmatpush1.bf16.msra.mxu0 0
        %509 = vmatprep.subr.bf16.mxu0 0
        %510 = vmatpush1.bf16.msra.mxu0 0
        %511 = vmatprep.mubr.bf16.mxu0 0
        %512 = vmatmul.mubr.bf16.gmra.mrb[0].mxu0 %v464
        %v513 = vpop.f32.mrb[0].mxu0
        %v514 = vadd.f32 %v324, %v513
        %v515 = vpop.f32.mrb[0].mxu0
        %v516 = vadd.f32 %v324, %v515
        %v517 = vpop.f32.mrb[0].mxu0
        %v518 = vpop.f32.mrb[0].mxu0
        %519 = vdwg.mxu0
        %520 = vmatprep.subr.bf16.mxu0 %v413
        %521 = vmatpush1.bf16.msra.mxu0 %v412
        %522 = vmatprep.subr.bf16.mxu0 %v417
        %523 = vmatpush1.bf16.msra.mxu0 %v416
        %524 = vmatprep.subr.bf16.mxu0 %v421
        %525 = vmatpush1.bf16.msra.mxu0 %v420
        %526 = vmatprep.subr.bf16.mxu0 %v425
        %527 = vmatpush1.bf16.msra.mxu0 %v424
        %528 = vmatprep.subr.bf16.mxu0 %v429
        %529 = vmatpush1.bf16.msra.mxu0 %v428
        %530 = vmatprep.subr.bf16.mxu0 %v433
        %531 = vmatpush1.bf16.msra.mxu0 %v432
        %532 = vmatprep.subr.bf16.mxu0 %v477
        %533 = vmatpush1.bf16.msra.mxu0 %v474
        %534 = vmatprep.subr.bf16.mxu0 0
        %535 = vmatpush1.bf16.msra.mxu0 0
        %536 = vmatprep.subr.bf16.mxu0 0
        %537 = vmatpush1.bf16.msra.mxu0 0
        %538 = vmatprep.subr.bf16.mxu0 0
        %539 = vmatpush1.bf16.msra.mxu0 0
        %540 = vmatprep.subr.bf16.mxu0 0
        %541 = vmatpush1.bf16.msra.mxu0 0
        %542 = vmatprep.subr.bf16.mxu0 0
        %543 = vmatpush1.bf16.msra.mxu0 0
        %544 = vmatprep.subr.bf16.mxu0 0
        %545 = vmatpush1.bf16.msra.mxu0 0
        %546 = vmatprep.subr.bf16.mxu0 0
        %547 = vmatpush1.bf16.msra.mxu0 0
        %548 = vmatprep.subr.bf16.mxu0 0
        %549 = vmatpush1.bf16.msra.mxu0 0
        %550 = vmatprep.subr.bf16.mxu0 0
        %551 = vmatpush1.bf16.msra.mxu0 0
        %552 = vmatprep.mubr.bf16.mxu0 0
        %553 = vmatmul.mubr.bf16.gmra.mrb[0].mxu0 %v464
        %v554 = vpop.f32.mrb[0].mxu0
        %v555 = vadd.f32 %v324, %v554
        %v556 = vpop.f32.mrb[0].mxu0
        %v557 = vadd.f32 %v324, %v556
        %v558 = vpop.f32.mrb[0].mxu0
        %v559 = vpop.f32.mrb[0].mxu0
        %560 = vdwg.mxu0
        %v565 = vcombine.low %v514, %v516
        %v566 = vcombine.low %v555, %v557
        %569 = vst [vmem:[%s288] sm:$0x77] %v565
        %570 = vst [vmem:[%s288 + $0x8] sm:$0x77] %v566
        %s571 = smul.u32 4, %s19
        %p572 = scmp.lt.s32.totalorder %s18, 0
        %s573 = scalar_select %p572, %s18, 0
        %p574 = scmp.lt.s32.totalorder %s571, 7
        %s575 = scalar_select %p574, %s571, 7
        %s576 = smul.addr %s573, 8
        %s577 = sadd.s32 %s575, %s576
        %s578 = smul.addr %s577, 4
        %s579 = scalar_lea.vmem %s3, %s578
        // Predicated region
        $region56: #{state_decoder_forward.7} parent=50 // pred_check
          %p580 = pneg %p121
        $region57: #{state_decoder_forward.7} parent=50 // pred_check_branch
          %582 = sbr.rel (%p580) target = $region59
        $region58: #{state_decoder_forward.7} parent=50 // pred_region
          %s583 = smul.u32 4, %s19
        $region59: #{state_decoder_forward.7} parent=50 // pred_fallthru
          _
      $region51: #{state_decoder_forward.7} parent=5 // pred_fallthru
        _
      %p584 = scmp.le.s32.totalorder 2, %s9
      // Predicated region
      $region60: #{state_decoder_forward.7} parent=5 // pred_check
        %p585 = pneg %p584
      $region61: #{state_decoder_forward.7} parent=5 // pred_check_branch
        %587 = sbr.rel (%p585) target = $region63
      $region62: #{state_decoder_forward.7} parent=5 // pred_region
        %s588 = ssub.s32 %s9, 2
        // Predicated region
        $region64: #{state_decoder_forward.7} parent=62 // pred_check
          %p589 = pneg %p127
        $region65: #{state_decoder_forward.7} parent=62 // pred_check_branch
          %591 = sbr.rel (%p589) target = $region67
        $region66: #{state_decoder_forward.7} parent=62 // pred_region
          %s592 = smul.u32 4, %s21
          %p593 = scmp.lt.s32.totalorder %s20, 0
          %s594 = scalar_select %p593, %s20, 0
          %p595 = scmp.lt.s32.totalorder %s592, 7
          %s596 = scalar_select %p595, %s592, 7
          %s597 = smul.addr %s594, 8
          %s598 = sadd.s32 %s596, %s597
          %s599 = smul.addr %s598, 4
          %s600 = scalar_lea.vmem %s3, %s599
        $region67: #{state_decoder_forward.7} parent=62 // pred_fallthru
          _
      $region63: #{state_decoder_forward.7} parent=5 // pred_fallthru
        _
    $region6: #{state_decoder_forward.7} parent=1 // loop_footer
      %s13 = sadd.s32 1, %s9
    $region7: #{state_decoder_forward.7} parent=1 // loop_footer_branch
      %8 = sbr.rel target = $region3
    $region8: #{state_decoder_forward.7} parent=1 // loop_exit
      _

</llo_original>
